<compile_context>
chip_gen: v7x
topology: tpu7x:2x2x1
jax: 0.10.0
libtpu: 0.0.40
codegen_flags: <defaults>
</compile_context>

<pallas_src>
import math
import functools

import jax
import jax.numpy as jnp
from jax.experimental import pallas as pl
from jax.experimental.pallas import tpu as pltpu


def _layernorm(x, gamma, beta, eps=1e-5):
    mu = jnp.mean(x, axis=-1, keepdims=True)
    var = jnp.mean((x - mu) ** 2, axis=-1, keepdims=True)
    return (x - mu) * jax.lax.rsqrt(var + eps) * gamma + beta


# ---------------- Fused kernel: QKV proj + attention + fc + LN1 + FFN + LN2 ----------------
def block_kernel(qh_ref, kh_ref, vh_ref, bias_ref, qres_ref,
                 wq_ref, wk_ref, wv_ref, wfc_ref,
                 w1_ref, b1_ref, w2_ref, b2_ref,
                 g1_ref, bt1_ref, g2_ref, bt2_ref,
                 o_ref, *, heads):
    G, S, D = qh_ref.shape              # block: (b_blk*heads, S, D)
    B = G // heads
    E = heads * D

    # Shared per-head (D, D) Linear as one big matmul (bf16 inputs, f32 acc).
    q2 = qh_ref[...].reshape(G * S, D)
    k2 = kh_ref[...].reshape(G * S, D)
    v2 = vh_ref[...].reshape(G * S, D)
    Q = jnp.dot(q2, wq_ref[...], preferred_element_type=jnp.float32).reshape(G, S, D)
    K = jnp.dot(k2, wk_ref[...], preferred_element_type=jnp.float32).reshape(G, S, D)
    V = jnp.dot(v2, wv_ref[...], preferred_element_type=jnp.float32).reshape(G, S, D)

    # Scores; 1/sqrt(E) is already folded into wq.
    energy = jnp.einsum('gqd,gkd->gqk',
                        Q.astype(jnp.bfloat16), K.astype(jnp.bfloat16),
                        preferred_element_type=jnp.float32)          # (G, S, S)

    # Additive mask bias (precomputed in wrapper), broadcast over heads.
    energy = (energy.reshape(B, heads, S, S)
              + bias_ref[...][:, None]).reshape(G, S, S)

    # Softmax in f32; divide goes to EUP via approximate reciprocal.
    m_max = jnp.max(energy, axis=-1, keepdims=True)
    p = jnp.exp(energy - m_max)
    denom = jnp.sum(p, axis=-1, keepdims=True)
    attn = p * pl.reciprocal(denom, approx=True)

    ctx = jnp.einsum('gqk,gkd->gqd',
                     attn.astype(jnp.bfloat16), V.astype(jnp.bfloat16),
                     preferred_element_type=jnp.float32)             # (G, S, D)

    # fc projection straight from head-major ctx: sum_h ctx_h @ Wfc_h -> (B*S, E).
    ctx4 = ctx.reshape(B, heads, S, D)
    attn_out = jnp.zeros((B * S, E), jnp.float32)
    for h in range(heads):
        attn_out = attn_out + jnp.dot(
            ctx4[:, h].reshape(B * S, D).astype(jnp.bfloat16),
            wfc_ref[h], preferred_element_type=jnp.float32)

    # Residual + LN1 + FFN + residual + LN2 on sequence-major rows.
    q_rows = qres_ref[...].reshape(B * S, E)
    x1 = _layernorm(attn_out + q_rows, g1_ref[...], bt1_ref[...])

    hdn = jnp.dot(x1.astype(jnp.bfloat16), w1_ref[...],
                  preferred_element_type=jnp.float32) + b1_ref[...]
    hdn = jnp.maximum(hdn, 0.0)
    fw = jnp.dot(hdn.astype(jnp.bfloat16), w2_ref[...],
                 preferred_element_type=jnp.float32) + b2_ref[...]

    out = _layernorm(fw + x1, g2_ref[...], bt2_ref[...])
    o_ref[...] = out.reshape(B, S, E).astype(o_ref.dtype)


def _largest_divisor_at_most(n, cap):
    for d in range(min(n, cap), 0, -1):
        if n % d == 0:
            return d
    return 1


def transformer_block(value, key, query, mask, params, heads):
    N, S, E = query.shape
    D = E // heads
    F = params["w1"].shape[0]
    scale = 1.0 / math.sqrt(E)
    bf16 = jnp.bfloat16

    # Weight prep (all matmuls in-kernel are x @ W; bf16 for MXU inputs).
    wq_t = (params["wq"].T * scale).astype(bf16)   # scale folded into Q projection
    wk_t = params["wk"].T.astype(bf16)
    wv_t = params["wv"].T.astype(bf16)
    # fc weight (E, E) -> per-head slabs (heads, D, E) so the kernel applies it on the
    # head-major context without any in-kernel transpose.
    wfc_h = params["wfc"].T.reshape(heads, D, E).astype(bf16)
    w1_t = params["w1"].T.astype(bf16)
    w2_t = params["w2"].T.astype(bf16)
    b1 = params["b1"].reshape(1, F).astype(jnp.float32)
    b2 = params["b2"].reshape(1, E).astype(jnp.float32)
    g1 = params["g1"].reshape(1, E).astype(jnp.float32)
    bt1 = params["bt1"].reshape(1, E).astype(jnp.float32)
    g2 = params["g2"].reshape(1, E).astype(jnp.float32)
    bt2 = params["bt2"].reshape(1, E).astype(jnp.float32)

    # Head-major layout (wrapper-side layout plumbing): (N, S, E) -> (N*heads, S, D).
    def to_heads(x):
        return x.reshape(N, S, heads, D).transpose(0, 2, 1, 3).reshape(N * heads, S, D)

    q_h = to_heads(query).astype(bf16)
    k_h = to_heads(key).astype(bf16)
    v_h = to_heads(value).astype(bf16)

    # Mask -> additive bias once, in the wrapper.
    bias = jnp.where(mask == 0, jnp.float32(-1e20), jnp.float32(0.0))   # (N, S, S)
    q_rows = query.astype(jnp.float32)                                  # residual source

    # Batch-block so each grid step feeds the MXU with a few hundred rows.
    b_blk = _largest_divisor_at_most(N, max(1, 256 // S))
    grid = (N // b_blk,)
    G = b_blk * heads

    head_spec = pl.BlockSpec((G, S, D), lambda n: (n, 0, 0))
    bias_spec = pl.BlockSpec((b_blk, S, S), lambda n: (n, 0, 0))
    row3_spec = pl.BlockSpec((b_blk, S, E), lambda n: (n, 0, 0))
    wdd_spec = pl.BlockSpec((D, D), lambda n: (0, 0))
    wfc_spec = pl.BlockSpec((heads, D, E), lambda n: (0, 0, 0))
    w1_spec = pl.BlockSpec((E, F), lambda n: (0, 0))
    w2_spec = pl.BlockSpec((F, E), lambda n: (0, 0))
    vecF_spec = pl.BlockSpec((1, F), lambda n: (0, 0))
    vecE_spec = pl.BlockSpec((1, E), lambda n: (0, 0))

    cparams = pltpu.CompilerParams(
        dimension_semantics=("parallel",),
        vmem_limit_bytes=64 * 1024 * 1024)

    out = pl.pallas_call(
        functools.partial(block_kernel, heads=heads),
        out_shape=jax.ShapeDtypeStruct((N, S, E), jnp.float32),
        grid_spec=pltpu.PrefetchScalarGridSpec(
            num_scalar_prefetch=0,
            grid=grid,
            in_specs=[head_spec, head_spec, head_spec, bias_spec, row3_spec,
                      wdd_spec, wdd_spec, wdd_spec, wfc_spec,
                      w1_spec, vecF_spec, w2_spec, vecE_spec,
                      vecE_spec, vecE_spec, vecE_spec, vecE_spec],
            out_specs=row3_spec),
        compiler_params=cparams,
    )(q_h, k_h, v_h, bias, q_rows,
      wq_t, wk_t, wv_t, wfc_h,
      w1_t, b1, w2_t, b2,
      g1, bt1, g2, bt2)

    return out


def _reference(value, key, query, mask, params, heads):
    """Pure-JAX f32 mirror of the PyTorch forward (eval mode)."""
    N, S, E = query.shape
    D = E // heads
    v = value.reshape(N, S, heads, D) @ params["wv"].T
    k = key.reshape(N, S, heads, D) @ params["wk"].T
    q = query.reshape(N, S, heads, D) @ params["wq"].T
    energy = jnp.einsum("nqhd,nkhd->nhqk", q, k)
    energy = jnp.where(mask[:, None, :, :] == 0, -1e20, energy)
    attn = jax.nn.softmax(energy / math.sqrt(E), axis=3)
    out = jnp.einsum("nhql,nlhd->nqhd", attn, v).reshape(N, S, E)
    out = out @ params["wfc"].T

    def ln(x, g, b):
        mu = jnp.mean(x, axis=-1, keepdims=True)
        var = jnp.mean((x - mu) ** 2, axis=-1, keepdims=True)
        return (x - mu) / jnp.sqrt(var + 1e-5) * g + b

    x = ln(out + query, params["g1"], params["bt1"])
    fw = jax.nn.relu(x @ params["w1"].T + params["b1"]) @ params["w2"].T + params["b2"]
    return ln(fw + x, params["g2"], params["bt2"])


if __name__ == "__main__":
    N, S = 2, 8
    embed_size, heads, forward_expansion = 32, 4, 4
    D = embed_size // heads
    F = forward_expansion * embed_size

    root = jax.random.PRNGKey(0)
    ks = jax.random.split(root, 12)

    params = {
        "wv": jax.random.normal(ks[0], (D, D), jnp.float32) * 0.2,
        "wk": jax.random.normal(ks[1], (D, D), jnp.float32) * 0.2,
        "wq": jax.random.normal(ks[2], (D, D), jnp.float32) * 0.2,
        "wfc": jax.random.normal(ks[3], (embed_size, embed_size), jnp.float32) * 0.1,
        "w1": jax.random.normal(ks[4], (F, embed_size), jnp.float32) * 0.1,
        "b1": jax.random.normal(ks[5], (F,), jnp.float32) * 0.05,
        "w2": jax.random.normal(ks[6], (embed_size, F), jnp.float32) * 0.1,
        "b2": jax.random.normal(ks[7], (embed_size,), jnp.float32) * 0.05,
        "g1": jnp.ones((embed_size,), jnp.float32),
        "bt1": jnp.zeros((embed_size,), jnp.float32),
        "g2": jnp.ones((embed_size,), jnp.float32),
        "bt2": jnp.zeros((embed_size,), jnp.float32),
    }

    value = jax.random.normal(ks[8], (N, S, embed_size), jnp.float32)
    key = jax.random.normal(ks[9], (N, S, embed_size), jnp.float32)
    query = jax.random.normal(ks[10], (N, S, embed_size), jnp.float32)
    # causal mask (1 = attend, 0 = masked), same for every head
    mask = jnp.tril(jnp.ones((S, S), jnp.float32))[None].repeat(N, axis=0)

    out = transformer_block(value, key, query, mask, params, heads)
    out = jax.block_until_ready(out)

    ref = _reference(value, key, query, mask, params, heads)
    assert out.shape == (N, S, embed_size)
    max_err = float(jnp.max(jnp.abs(out - ref)))
    # bf16 MXU inputs + approximate softmax reciprocal -> tolerance looser than pure f32.
    assert jnp.allclose(out, ref, rtol=5e-2, atol=5e-2), f"mismatch vs reference (max abs err {max_err})"

    print("KERNEL_OK")
</pallas_src>

<mosaic_0001>
module attributes {stable_mosaic.version = 11 : i64} {
  func.func @block_kernel(%arg0: i32, %arg1: memref<8x8x8xbf16, #tpu.memory_space<vmem>>, %arg2: memref<8x8x8xbf16, #tpu.memory_space<vmem>>, %arg3: memref<8x8x8xbf16, #tpu.memory_space<vmem>>, %arg4: memref<2x8x8xf32, #tpu.memory_space<vmem>>, %arg5: memref<2x8x32xf32, #tpu.memory_space<vmem>>, %arg6: memref<8x8xbf16, #tpu.memory_space<vmem>>, %arg7: memref<8x8xbf16, #tpu.memory_space<vmem>>, %arg8: memref<8x8xbf16, #tpu.memory_space<vmem>>, %arg9: memref<4x8x32xbf16, #tpu.memory_space<vmem>>, %arg10: memref<32x128xbf16, #tpu.memory_space<vmem>>, %arg11: memref<1x128xf32, #tpu.memory_space<vmem>>, %arg12: memref<128x32xbf16, #tpu.memory_space<vmem>>, %arg13: memref<1x32xf32, #tpu.memory_space<vmem>>, %arg14: memref<1x32xf32, #tpu.memory_space<vmem>>, %arg15: memref<1x32xf32, #tpu.memory_space<vmem>>, %arg16: memref<1x32xf32, #tpu.memory_space<vmem>>, %arg17: memref<1x32xf32, #tpu.memory_space<vmem>>, %arg18: memref<2x8x32xf32, #tpu.memory_space<vmem>>) attributes {dimension_semantics = [#tpu.dimension_semantics<parallel>], iteration_bounds = array<i64: 1>, scalar_prefetch = 0 : i64, scratch_operands = 0 : i64, tpu.core_type = #tpu.core_type<tc>, window_params = [{transform_indices = @transform_0, window_bounds = array<i64: 8, 8, 8>}, {transform_indices = @transform_1, window_bounds = array<i64: 8, 8, 8>}, {transform_indices = @transform_2, window_bounds = array<i64: 8, 8, 8>}, {transform_indices = @transform_3, window_bounds = array<i64: 2, 8, 8>}, {transform_indices = @transform_4, window_bounds = array<i64: 2, 8, 32>}, {pipeline_mode = #tpu.pipeline_mode<synchronous>, transform_indices = @transform_5, window_bounds = array<i64: 8, 8>}, {pipeline_mode = #tpu.pipeline_mode<synchronous>, transform_indices = @transform_6, window_bounds = array<i64: 8, 8>}, {pipeline_mode = #tpu.pipeline_mode<synchronous>, transform_indices = @transform_7, window_bounds = array<i64: 8, 8>}, {pipeline_mode = #tpu.pipeline_mode<synchronous>, transform_indices = @transform_8, window_bounds = array<i64: 4, 8, 32>}, {pipeline_mode = #tpu.pipeline_mode<synchronous>, transform_indices = @transform_9, window_bounds = array<i64: 32, 128>}, {pipeline_mode = #tpu.pipeline_mode<synchronous>, transform_indices = @transform_10, window_bounds = array<i64: 1, 128>}, {pipeline_mode = #tpu.pipeline_mode<synchronous>, transform_indices = @transform_11, window_bounds = array<i64: 128, 32>}, {pipeline_mode = #tpu.pipeline_mode<synchronous>, transform_indices = @transform_12, window_bounds = array<i64: 1, 32>}, {pipeline_mode = #tpu.pipeline_mode<synchronous>, transform_indices = @transform_13, window_bounds = array<i64: 1, 32>}, {pipeline_mode = #tpu.pipeline_mode<synchronous>, transform_indices = @transform_14, window_bounds = array<i64: 1, 32>}, {pipeline_mode = #tpu.pipeline_mode<synchronous>, transform_indices = @transform_15, window_bounds = array<i64: 1, 32>}, {pipeline_mode = #tpu.pipeline_mode<synchronous>, transform_indices = @transform_16, window_bounds = array<i64: 1, 32>}, {transform_indices = @transform_17, window_bounds = array<i64: 2, 8, 32>}]} {
    %c0 = arith.constant 0 : index
    %c0_0 = arith.constant 0 : index
    %c0_1 = arith.constant 0 : index
    %0 = vector.load %arg1[%c0, %c0_0, %c0_1] : memref<8x8x8xbf16, #tpu.memory_space<vmem>>, vector<8x8x8xbf16>
    %1 = vector.shape_cast %0 : vector<8x8x8xbf16> to vector<64x8xbf16>
    %c0_2 = arith.constant 0 : index
    %c0_3 = arith.constant 0 : index
    %c0_4 = arith.constant 0 : index
    %2 = vector.load %arg2[%c0_2, %c0_3, %c0_4] : memref<8x8x8xbf16, #tpu.memory_space<vmem>>, vector<8x8x8xbf16>
    %3 = vector.shape_cast %2 : vector<8x8x8xbf16> to vector<64x8xbf16>
    %c0_5 = arith.constant 0 : index
    %c0_6 = arith.constant 0 : index
    %c0_7 = arith.constant 0 : index
    %4 = vector.load %arg3[%c0_5, %c0_6, %c0_7] : memref<8x8x8xbf16, #tpu.memory_space<vmem>>, vector<8x8x8xbf16>
    %5 = vector.shape_cast %4 : vector<8x8x8xbf16> to vector<64x8xbf16>
    %c0_8 = arith.constant 0 : index
    %c0_9 = arith.constant 0 : index
    %6 = vector.load %arg6[%c0_8, %c0_9] : memref<8x8xbf16, #tpu.memory_space<vmem>>, vector<8x8xbf16>
    %cst = arith.constant dense<0.000000e+00> : vector<64x8xf32>
    %7 = tpu.matmul %1, %6, %cst {dimension_numbers = #tpu.dot_dimension_numbers<[1], [0], [0], [1], [0, 0, 1, 1], [], []>} : vector<64x8xbf16>, vector<8x8xbf16>, vector<64x8xf32> -> vector<64x8xf32>
    %8 = vector.shape_cast %7 : vector<64x8xf32> to vector<8x8x8xf32>
    %c0_10 = arith.constant 0 : index
    %c0_11 = arith.constant 0 : index
    %9 = vector.load %arg7[%c0_10, %c0_11] : memref<8x8xbf16, #tpu.memory_space<vmem>>, vector<8x8xbf16>
    %cst_12 = arith.constant dense<0.000000e+00> : vector<64x8xf32>
    %10 = tpu.matmul %3, %9, %cst_12 {dimension_numbers = #tpu.dot_dimension_numbers<[1], [0], [0], [1], [0, 0, 1, 1], [], []>} : vector<64x8xbf16>, vector<8x8xbf16>, vector<64x8xf32> -> vector<64x8xf32>
    %11 = vector.shape_cast %10 : vector<64x8xf32> to vector<8x8x8xf32>
    %c0_13 = arith.constant 0 : index
    %c0_14 = arith.constant 0 : index
    %12 = vector.load %arg8[%c0_13, %c0_14] : memref<8x8xbf16, #tpu.memory_space<vmem>>, vector<8x8xbf16>
    %cst_15 = arith.constant dense<0.000000e+00> : vector<64x8xf32>
    %13 = tpu.matmul %5, %12, %cst_15 {dimension_numbers = #tpu.dot_dimension_numbers<[1], [0], [0], [1], [0, 0, 1, 1], [], []>} : vector<64x8xbf16>, vector<8x8xbf16>, vector<64x8xf32> -> vector<64x8xf32>
    %14 = vector.shape_cast %13 : vector<64x8xf32> to vector<8x8x8xf32>
    %15 = arith.truncf %8 : vector<8x8x8xf32> to vector<8x8x8xbf16>
    %16 = arith.truncf %11 : vector<8x8x8xf32> to vector<8x8x8xbf16>
    "tpu.trace_start"() <{level = 10 : i32, message = "gqd,gkd->gqk"}> : () -> ()
    %cst_16 = arith.constant dense<0.000000e+00> : vector<8x8x8xf32>
    %17 = tpu.matmul %15, %16, %cst_16 {dimension_numbers = #tpu.dot_dimension_numbers<[2], [2], [1], [1], [0, 0, 0, 1, 1, 1], [0], [0]>} : vector<8x8x8xbf16>, vector<8x8x8xbf16>, vector<8x8x8xf32> -> vector<8x8x8xf32>
    "tpu.trace_stop"() : () -> ()
    %18 = vector.shape_cast %17 : vector<8x8x8xf32> to vector<2x4x8x8xf32>
    %c0_17 = arith.constant 0 : index
    %c0_18 = arith.constant 0 : index
    %c0_19 = arith.constant 0 : index
    %19 = vector.load %arg4[%c0_17, %c0_18, %c0_19] : memref<2x8x8xf32, #tpu.memory_space<vmem>>, vector<2x8x8xf32>
    %20 = vector.shape_cast %19 : vector<2x8x8xf32> to vector<2x1x8x8xf32>
    %21 = vector.broadcast %20 : vector<2x1x8x8xf32> to vector<2x4x8x8xf32>
    %22 = arith.addf %18, %21 : vector<2x4x8x8xf32>
    %23 = vector.shape_cast %22 : vector<2x4x8x8xf32> to vector<8x8x8xf32>
    %cst_20 = arith.constant dense<0xFF800000> : vector<8x8xf32>
    %24 = vector.multi_reduction <maximumf>, %23, %cst_20 [2] : vector<8x8x8xf32> to vector<8x8xf32>
    %25 = vector.shape_cast %24 : vector<8x8xf32> to vector<8x8x1xf32>
    %26 = vector.broadcast %25 : vector<8x8x1xf32> to vector<8x8x8xf32>
    %27 = arith.subf %23, %26 : vector<8x8x8xf32>
    %28 = math.exp %27 : vector<8x8x8xf32>
    %cst_21 = arith.constant dense<0.000000e+00> : vector<8x8xf32>
    %29 = vector.multi_reduction <add>, %28, %cst_21 [2] : vector<8x8x8xf32> to vector<8x8xf32>
    %30 = vector.shape_cast %29 : vector<8x8xf32> to vector<8x8x1xf32>
    %31 = tpu.reciprocal %30 {approx = true} : vector<8x8x1xf32> -> vector<8x8x1xf32>
    %32 = vector.broadcast %31 : vector<8x8x1xf32> to vector<8x8x8xf32>
    %33 = arith.mulf %28, %32 : vector<8x8x8xf32>
    %34 = arith.truncf %33 : vector<8x8x8xf32> to vector<8x8x8xbf16>
    %35 = arith.truncf %14 : vector<8x8x8xf32> to vector<8x8x8xbf16>
    "tpu.trace_start"() <{level = 10 : i32, message = "gqk,gkd->gqd"}> : () -> ()
    %cst_22 = arith.constant dense<0.000000e+00> : vector<8x8x8xf32>
    %36 = tpu.matmul %34, %35, %cst_22 {dimension_numbers = #tpu.dot_dimension_numbers<[2], [1], [1], [2], [0, 0, 0, 1, 1, 2], [0], [0]>} : vector<8x8x8xbf16>, vector<8x8x8xbf16>, vector<8x8x8xf32> -> vector<8x8x8xf32>
    "tpu.trace_stop"() : () -> ()
    %37 = vector.shape_cast %36 : vector<8x8x8xf32> to vector<2x4x8x8xf32>
    %cst_23 = arith.constant 0.000000e+00 : f32
    %38 = vector.broadcast %cst_23 : f32 to vector<16x32xf32>
    %39 = vector.extract_strided_slice %37 {offsets = [0, 0, 0, 0], sizes = [2, 1, 8, 8], strides = [1, 1, 1, 1]} : vector<2x4x8x8xf32> to vector<2x1x8x8xf32>
    %40 = vector.shape_cast %39 : vector<2x1x8x8xf32> to vector<2x8x8xf32>
    %41 = vector.shape_cast %40 : vector<2x8x8xf32> to vector<16x8xf32>
    %42 = arith.truncf %41 : vector<16x8xf32> to vector<16x8xbf16>
    %c0_24 = arith.constant 0 : index
    %c0_25 = arith.constant 0 : index
    %c0_26 = arith.constant 0 : index
    %43 = vector.load %arg9[%c0_24, %c0_25, %c0_26] : memref<4x8x32xbf16, #tpu.memory_space<vmem>>, vector<1x8x32xbf16>
    %44 = vector.shape_cast %43 : vector<1x8x32xbf16> to vector<8x32xbf16>
    %cst_27 = arith.constant dense<0.000000e+00> : vector<16x32xf32>
    %45 = tpu.matmul %42, %44, %cst_27 {dimension_numbers = #tpu.dot_dimension_numbers<[1], [0], [0], [1], [0, 0, 1, 1], [], []>} : vector<16x8xbf16>, vector<8x32xbf16>, vector<16x32xf32> -> vector<16x32xf32>
    %46 = arith.addf %38, %45 : vector<16x32xf32>
    %47 = vector.extract_strided_slice %37 {offsets = [0, 1, 0, 0], sizes = [2, 1, 8, 8], strides = [1, 1, 1, 1]} : vector<2x4x8x8xf32> to vector<2x1x8x8xf32>
    %48 = vector.shape_cast %47 : vector<2x1x8x8xf32> to vector<2x8x8xf32>
    %49 = vector.shape_cast %48 : vector<2x8x8xf32> to vector<16x8xf32>
    %50 = arith.truncf %49 : vector<16x8xf32> to vector<16x8xbf16>
    %c1 = arith.constant 1 : index
    %c0_28 = arith.constant 0 : index
    %c0_29 = arith.constant 0 : index
    %51 = vector.load %arg9[%c1, %c0_28, %c0_29] : memref<4x8x32xbf16, #tpu.memory_space<vmem>>, vector<1x8x32xbf16>
    %52 = vector.shape_cast %51 : vector<1x8x32xbf16> to vector<8x32xbf16>
    %cst_30 = arith.constant dense<0.000000e+00> : vector<16x32xf32>
    %53 = tpu.matmul %50, %52, %cst_30 {dimension_numbers = #tpu.dot_dimension_numbers<[1], [0], [0], [1], [0, 0, 1, 1], [], []>} : vector<16x8xbf16>, vector<8x32xbf16>, vector<16x32xf32> -> vector<16x32xf32>
    %54 = arith.addf %46, %53 : vector<16x32xf32>
    %55 = vector.extract_strided_slice %37 {offsets = [0, 2, 0, 0], sizes = [2, 1, 8, 8], strides = [1, 1, 1, 1]} : vector<2x4x8x8xf32> to vector<2x1x8x8xf32>
    %56 = vector.shape_cast %55 : vector<2x1x8x8xf32> to vector<2x8x8xf32>
    %57 = vector.shape_cast %56 : vector<2x8x8xf32> to vector<16x8xf32>
    %58 = arith.truncf %57 : vector<16x8xf32> to vector<16x8xbf16>
    %c2 = arith.constant 2 : index
    %c0_31 = arith.constant 0 : index
    %c0_32 = arith.constant 0 : index
    %59 = vector.load %arg9[%c2, %c0_31, %c0_32] : memref<4x8x32xbf16, #tpu.memory_space<vmem>>, vector<1x8x32xbf16>
    %60 = vector.shape_cast %59 : vector<1x8x32xbf16> to vector<8x32xbf16>
    %cst_33 = arith.constant dense<0.000000e+00> : vector<16x32xf32>
    %61 = tpu.matmul %58, %60, %cst_33 {dimension_numbers = #tpu.dot_dimension_numbers<[1], [0], [0], [1], [0, 0, 1, 1], [], []>} : vector<16x8xbf16>, vector<8x32xbf16>, vector<16x32xf32> -> vector<16x32xf32>
    %62 = arith.addf %54, %61 : vector<16x32xf32>
    %63 = vector.extract_strided_slice %37 {offsets = [0, 3, 0, 0], sizes = [2, 1, 8, 8], strides = [1, 1, 1, 1]} : vector<2x4x8x8xf32> to vector<2x1x8x8xf32>
    %64 = vector.shape_cast %63 : vector<2x1x8x8xf32> to vector<2x8x8xf32>
    %65 = vector.shape_cast %64 : vector<2x8x8xf32> to vector<16x8xf32>
    %66 = arith.truncf %65 : vector<16x8xf32> to vector<16x8xbf16>
    %c3 = arith.constant 3 : index
    %c0_34 = arith.constant 0 : index
    %c0_35 = arith.constant 0 : index
    %67 = vector.load %arg9[%c3, %c0_34, %c0_35] : memref<4x8x32xbf16, #tpu.memory_space<vmem>>, vector<1x8x32xbf16>
    %68 = vector.shape_cast %67 : vector<1x8x32xbf16> to vector<8x32xbf16>
    %cst_36 = arith.constant dense<0.000000e+00> : vector<16x32xf32>
    %69 = tpu.matmul %66, %68, %cst_36 {dimension_numbers = #tpu.dot_dimension_numbers<[1], [0], [0], [1], [0, 0, 1, 1], [], []>} : vector<16x8xbf16>, vector<8x32xbf16>, vector<16x32xf32> -> vector<16x32xf32>
    %70 = arith.addf %62, %69 : vector<16x32xf32>
    %c0_37 = arith.constant 0 : index
    %c0_38 = arith.constant 0 : index
    %c0_39 = arith.constant 0 : index
    %71 = vector.load %arg5[%c0_37, %c0_38, %c0_39] : memref<2x8x32xf32, #tpu.memory_space<vmem>>, vector<2x8x32xf32>
    %72 = vector.shape_cast %71 : vector<2x8x32xf32> to vector<16x32xf32>
    %73 = arith.addf %70, %72 : vector<16x32xf32>
    %c0_40 = arith.constant 0 : index
    %c0_41 = arith.constant 0 : index
    %74 = vector.load %arg14[%c0_40, %c0_41] : memref<1x32xf32, #tpu.memory_space<vmem>>, vector<1x32xf32>
    %c0_42 = arith.constant 0 : index
    %c0_43 = arith.constant 0 : index
    %75 = vector.load %arg15[%c0_42, %c0_43] : memref<1x32xf32, #tpu.memory_space<vmem>>, vector<1x32xf32>
    %cst_44 = arith.constant dense<0.000000e+00> : vector<16xf32>
    %76 = vector.multi_reduction <add>, %73, %cst_44 [1] : vector<16x32xf32> to vector<16xf32>
    %77 = vector.shape_cast %76 : vector<16xf32> to vector<16x1xf32>
    %cst_45 = arith.constant 3.200000e+01 : f32
    %78 = vector.broadcast %cst_45 : f32 to vector<16x1xf32>
    %79 = arith.divf %77, %78 : vector<16x1xf32>
    %80 = vector.broadcast %79 : vector<16x1xf32> to vector<16x32xf32>
    %81 = arith.subf %73, %80 : vector<16x32xf32>
    %82 = arith.mulf %81, %81 : vector<16x32xf32>
    %cst_46 = arith.constant dense<0.000000e+00> : vector<16xf32>
    %83 = vector.multi_reduction <add>, %82, %cst_46 [1] : vector<16x32xf32> to vector<16xf32>
    %84 = vector.shape_cast %83 : vector<16xf32> to vector<16x1xf32>
    %cst_47 = arith.constant 3.200000e+01 : f32
    %85 = vector.broadcast %cst_47 : f32 to vector<16x1xf32>
    %86 = arith.divf %84, %85 : vector<16x1xf32>
    %87 = vector.broadcast %79 : vector<16x1xf32> to vector<16x32xf32>
    %88 = arith.subf %73, %87 : vector<16x32xf32>
    %cst_48 = arith.constant 9.99999974E-6 : f32
    %89 = vector.broadcast %cst_48 : f32 to vector<16x1xf32>
    %90 = arith.addf %86, %89 : vector<16x1xf32>
    %91 = math.rsqrt %90 : vector<16x1xf32>
    %92 = vector.broadcast %91 : vector<16x1xf32> to vector<16x32xf32>
    %93 = arith.mulf %88, %92 : vector<16x32xf32>
    %94 = vector.broadcast %74 : vector<1x32xf32> to vector<16x32xf32>
    %95 = arith.mulf %93, %94 : vector<16x32xf32>
    %96 = vector.broadcast %75 : vector<1x32xf32> to vector<16x32xf32>
    %97 = arith.addf %95, %96 : vector<16x32xf32>
    %98 = arith.truncf %97 : vector<16x32xf32> to vector<16x32xbf16>
    %c0_49 = arith.constant 0 : index
    %c0_50 = arith.constant 0 : index
    %99 = vector.load %arg10[%c0_49, %c0_50] : memref<32x128xbf16, #tpu.memory_space<vmem>>, vector<32x128xbf16>
    %cst_51 = arith.constant dense<0.000000e+00> : vector<16x128xf32>
    %100 = tpu.matmul %98, %99, %cst_51 {dimension_numbers = #tpu.dot_dimension_numbers<[1], [0], [0], [1], [0, 0, 1, 1], [], []>} : vector<16x32xbf16>, vector<32x128xbf16>, vector<16x128xf32> -> vector<16x128xf32>
    %c0_52 = arith.constant 0 : index
    %c0_53 = arith.constant 0 : index
    %101 = vector.load %arg11[%c0_52, %c0_53] : memref<1x128xf32, #tpu.memory_space<vmem>>, vector<1x128xf32>
    %102 = vector.broadcast %101 : vector<1x128xf32> to vector<16x128xf32>
    %103 = arith.addf %100, %102 : vector<16x128xf32>
    %cst_54 = arith.constant 0.000000e+00 : f32
    %104 = vector.broadcast %cst_54 : f32 to vector<16x128xf32>
    %105 = arith.maximumf %103, %104 : vector<16x128xf32>
    %106 = arith.truncf %105 : vector<16x128xf32> to vector<16x128xbf16>
    %c0_55 = arith.constant 0 : index
    %c0_56 = arith.constant 0 : index
    %107 = vector.load %arg12[%c0_55, %c0_56] : memref<128x32xbf16, #tpu.memory_space<vmem>>, vector<128x32xbf16>
    %cst_57 = arith.constant dense<0.000000e+00> : vector<16x32xf32>
    %108 = tpu.matmul %106, %107, %cst_57 {dimension_numbers = #tpu.dot_dimension_numbers<[1], [0], [0], [1], [0, 0, 1, 1], [], []>} : vector<16x128xbf16>, vector<128x32xbf16>, vector<16x32xf32> -> vector<16x32xf32>
    %c0_58 = arith.constant 0 : index
    %c0_59 = arith.constant 0 : index
    %109 = vector.load %arg13[%c0_58, %c0_59] : memref<1x32xf32, #tpu.memory_space<vmem>>, vector<1x32xf32>
    %110 = vector.broadcast %109 : vector<1x32xf32> to vector<16x32xf32>
    %111 = arith.addf %108, %110 : vector<16x32xf32>
    %112 = arith.addf %111, %97 : vector<16x32xf32>
    %c0_60 = arith.constant 0 : index
    %c0_61 = arith.constant 0 : index
    %113 = vector.load %arg16[%c0_60, %c0_61] : memref<1x32xf32, #tpu.memory_space<vmem>>, vector<1x32xf32>
    %c0_62 = arith.constant 0 : index
    %c0_63 = arith.constant 0 : index
    %114 = vector.load %arg17[%c0_62, %c0_63] : memref<1x32xf32, #tpu.memory_space<vmem>>, vector<1x32xf32>
    %cst_64 = arith.constant dense<0.000000e+00> : vector<16xf32>
    %115 = vector.multi_reduction <add>, %112, %cst_64 [1] : vector<16x32xf32> to vector<16xf32>
    %116 = vector.shape_cast %115 : vector<16xf32> to vector<16x1xf32>
    %cst_65 = arith.constant 3.200000e+01 : f32
    %117 = vector.broadcast %cst_65 : f32 to vector<16x1xf32>
    %118 = arith.divf %116, %117 : vector<16x1xf32>
    %119 = vector.broadcast %118 : vector<16x1xf32> to vector<16x32xf32>
    %120 = arith.subf %112, %119 : vector<16x32xf32>
    %121 = arith.mulf %120, %120 : vector<16x32xf32>
    %cst_66 = arith.constant dense<0.000000e+00> : vector<16xf32>
    %122 = vector.multi_reduction <add>, %121, %cst_66 [1] : vector<16x32xf32> to vector<16xf32>
    %123 = vector.shape_cast %122 : vector<16xf32> to vector<16x1xf32>
    %cst_67 = arith.constant 3.200000e+01 : f32
    %124 = vector.broadcast %cst_67 : f32 to vector<16x1xf32>
    %125 = arith.divf %123, %124 : vector<16x1xf32>
    %126 = vector.broadcast %118 : vector<16x1xf32> to vector<16x32xf32>
    %127 = arith.subf %112, %126 : vector<16x32xf32>
    %cst_68 = arith.constant 9.99999974E-6 : f32
    %128 = vector.broadcast %cst_68 : f32 to vector<16x1xf32>
    %129 = arith.addf %125, %128 : vector<16x1xf32>
    %130 = math.rsqrt %129 : vector<16x1xf32>
    %131 = vector.broadcast %130 : vector<16x1xf32> to vector<16x32xf32>
    %132 = arith.mulf %127, %131 : vector<16x32xf32>
    %133 = vector.broadcast %113 : vector<1x32xf32> to vector<16x32xf32>
    %134 = arith.mulf %132, %133 : vector<16x32xf32>
    %135 = vector.broadcast %114 : vector<1x32xf32> to vector<16x32xf32>
    %136 = arith.addf %134, %135 : vector<16x32xf32>
    %137 = vector.shape_cast %136 : vector<16x32xf32> to vector<2x8x32xf32>
    %c0_69 = arith.constant 0 : index
    %c0_70 = arith.constant 0 : index
    %c0_71 = arith.constant 0 : index
    %138 = vector.load %arg18[%c0_69, %c0_70, %c0_71] : memref<2x8x32xf32, #tpu.memory_space<vmem>>, vector<2x8x32xf32>
    tpu.vector_store %arg18[%c0_69, %c0_70, %c0_71], %137 {strides = array<i32>} : memref<2x8x32xf32, #tpu.memory_space<vmem>>, vector<2x8x32xf32>,
    return
  }
  func.func @transform_0(%arg0: i32) -> (i32, i32, i32) {
    %c0_i32 = arith.constant 0 : i32
    %c0_i32_0 = arith.constant 0 : i32
    %c0_i32_1 = arith.constant 0 : i32
    return %arg0, %c0_i32, %c0_i32_0 : i32, i32, i32
  }
  func.func @transform_1(%arg0: i32) -> (i32, i32, i32) {
    %c0_i32 = arith.constant 0 : i32
    %c0_i32_0 = arith.constant 0 : i32
    %c0_i32_1 = arith.constant 0 : i32
    return %arg0, %c0_i32, %c0_i32_0 : i32, i32, i32
  }
  func.func @transform_2(%arg0: i32) -> (i32, i32, i32) {
    %c0_i32 = arith.constant 0 : i32
    %c0_i32_0 = arith.constant 0 : i32
    %c0_i32_1 = arith.constant 0 : i32
    return %arg0, %c0_i32, %c0_i32_0 : i32, i32, i32
  }
  func.func @transform_3(%arg0: i32) -> (i32, i32, i32) {
    %c0_i32 = arith.constant 0 : i32
    %c0_i32_0 = arith.constant 0 : i32
    %c0_i32_1 = arith.constant 0 : i32
    return %arg0, %c0_i32, %c0_i32_0 : i32, i32, i32
  }
  func.func @transform_4(%arg0: i32) -> (i32, i32, i32) {
    %c0_i32 = arith.constant 0 : i32
    %c0_i32_0 = arith.constant 0 : i32
    %c0_i32_1 = arith.constant 0 : i32
    return %arg0, %c0_i32, %c0_i32_0 : i32, i32, i32
  }
  func.func @transform_5(%arg0: i32) -> (i32, i32) {
    %c0_i32 = arith.constant 0 : i32
    %c0_i32_0 = arith.constant 0 : i32
    %c0_i32_1 = arith.constant 0 : i32
    return %c0_i32, %c0_i32_0 : i32, i32
  }
  func.func @transform_6(%arg0: i32) -> (i32, i32) {
    %c0_i32 = arith.constant 0 : i32
    %c0_i32_0 = arith.constant 0 : i32
    %c0_i32_1 = arith.constant 0 : i32
    return %c0_i32, %c0_i32_0 : i32, i32
  }
  func.func @transform_7(%arg0: i32) -> (i32, i32) {
    %c0_i32 = arith.constant 0 : i32
    %c0_i32_0 = arith.constant 0 : i32
    %c0_i32_1 = arith.constant 0 : i32
    return %c0_i32, %c0_i32_0 : i32, i32
  }
  func.func @transform_8(%arg0: i32) -> (i32, i32, i32) {
    %c0_i32 = arith.constant 0 : i32
    %c0_i32_0 = arith.constant 0 : i32
    %c0_i32_1 = arith.constant 0 : i32
    %c0_i32_2 = arith.constant 0 : i32
    return %c0_i32, %c0_i32_0, %c0_i32_1 : i32, i32, i32
  }
  func.func @transform_9(%arg0: i32) -> (i32, i32) {
    %c0_i32 = arith.constant 0 : i32
    %c0_i32_0 = arith.constant 0 : i32
    %c0_i32_1 = arith.constant 0 : i32
    return %c0_i32, %c0_i32_0 : i32, i32
  }
  func.func @transform_10(%arg0: i32) -> (i32, i32) {
    %c0_i32 = arith.constant 0 : i32
    %c0_i32_0 = arith.constant 0 : i32
    %c0_i32_1 = arith.constant 0 : i32
    return %c0_i32, %c0_i32_0 : i32, i32
  }
  func.func @transform_11(%arg0: i32) -> (i32, i32) {
    %c0_i32 = arith.constant 0 : i32
    %c0_i32_0 = arith.constant 0 : i32
    %c0_i32_1 = arith.constant 0 : i32
    return %c0_i32, %c0_i32_0 : i32, i32
  }
  func.func @transform_12(%arg0: i32) -> (i32, i32) {
    %c0_i32 = arith.constant 0 : i32
    %c0_i32_0 = arith.constant 0 : i32
    %c0_i32_1 = arith.constant 0 : i32
    return %c0_i32, %c0_i32_0 : i32, i32
  }
  func.func @transform_13(%arg0: i32) -> (i32, i32) {
    %c0_i32 = arith.constant 0 : i32
    %c0_i32_0 = arith.constant 0 : i32
    %c0_i32_1 = arith.constant 0 : i32
    return %c0_i32, %c0_i32_0 : i32, i32
  }
  func.func @transform_14(%arg0: i32) -> (i32, i32) {
    %c0_i32 = arith.constant 0 : i32
    %c0_i32_0 = arith.constant 0 : i32
    %c0_i32_1 = arith.constant 0 : i32
    return %c0_i32, %c0_i32_0 : i32, i32
  }
  func.func @transform_15(%arg0: i32) -> (i32, i32) {
    %c0_i32 = arith.constant 0 : i32
    %c0_i32_0 = arith.constant 0 : i32
    %c0_i32_1 = arith.constant 0 : i32
    return %c0_i32, %c0_i32_0 : i32, i32
  }
  func.func @transform_16(%arg0: i32) -> (i32, i32) {
    %c0_i32 = arith.constant 0 : i32
    %c0_i32_0 = arith.constant 0 : i32
    %c0_i32_1 = arith.constant 0 : i32
    return %c0_i32, %c0_i32_0 : i32, i32
  }
  func.func @transform_17(%arg0: i32) -> (i32, i32, i32) {
    %c0_i32 = arith.constant 0 : i32
    %c0_i32_0 = arith.constant 0 : i32
    %c0_i32_1 = arith.constant 0 : i32
    return %arg0, %c0_i32, %c0_i32_0 : i32, i32, i32
  }
}

</mosaic_0001>

<llo_original>
// kernel: tpu_custom_call.1
$region0: #{tpu_custom_call.1}
  #allocation0 [shape = 'u32[]', space=smem, size = 0x4, offset = 0x4, fixed_abs, tag = 'smem constant byte address 0x4 - core index']
  #allocation1 [shape = 'u32[144,128]{1,0:T(1,128)}', space=vmem, size = 0x12000, scoped, tag = 'internal scratch']
  %s0 = inlined_call_operand.hbm [shape: bf16[8,8,8], index: 0, kind: input, shape index: {}]
  %s1 = inlined_call_operand.hbm [shape: bf16[8,8,8], index: 1, kind: input, shape index: {}]
  %s2 = inlined_call_operand.hbm [shape: bf16[8,8,8], index: 2, kind: input, shape index: {}]
  %s3 = inlined_call_operand.hbm [shape: f32[2,8,8], index: 3, kind: input, shape index: {}]
  %s4 = inlined_call_operand.hbm [shape: f32[2,8,32], index: 4, kind: input, shape index: {}]
  %s5 = inlined_call_operand.hbm [shape: bf16[8,8], index: 5, kind: input, shape index: {}]
  %s6 = inlined_call_operand.hbm [shape: bf16[8,8], index: 6, kind: input, shape index: {}]
  %s7 = inlined_call_operand.hbm [shape: bf16[8,8], index: 7, kind: input, shape index: {}]
  %s8 = inlined_call_operand.hbm [shape: bf16[4,8,32], index: 8, kind: input, shape index: {}]
  %s9 = inlined_call_operand.hbm [shape: bf16[32,128], index: 9, kind: input, shape index: {}]
  %s10 = inlined_call_operand.hbm [shape: f32[1,128], index: 10, kind: input, shape index: {}]
  %s11 = inlined_call_operand.hbm [shape: bf16[128,32], index: 11, kind: input, shape index: {}]
  %s12 = inlined_call_operand.hbm [shape: f32[1,32], index: 12, kind: input, shape index: {}]
  %s13 = inlined_call_operand.hbm [shape: f32[1,32], index: 13, kind: input, shape index: {}]
  %s14 = inlined_call_operand.hbm [shape: f32[1,32], index: 14, kind: input, shape index: {}]
  %s15 = inlined_call_operand.hbm [shape: f32[1,32], index: 15, kind: input, shape index: {}]
  %s16 = inlined_call_operand.hbm [shape: f32[1,32], index: 16, kind: input, shape index: {}]
  %s17 = inlined_call_operand.hbm [shape: f32[2,8,32], index: 17, kind: output, shape index: {}]
  %s18 = sld [smem:[#allocation0]]
  $region146: #{tpu_custom_call.1} parent=0
    _
  %s20 = ssub.s32 1, %s18
  %s21 = scalar_select 0, %s20, %s18
  $region1: #{tpu_custom_call.1} parent=0
    #allocation2 [shape = 'u8[16384]{0}', space=vmem, size = 0x4000, scoped, tag = 'input window, operand 0, single buffered']
    #allocation3 [shape = 's32[1]{0}', space=sflag, size = 0x4, scoped, tag = 'scoped memory for tpu_custom_call.1']
    #allocation4 [shape = 's32[1]{0}', space=sflag, size = 0x4, scoped, tag = 'scoped memory for tpu_custom_call.1']
    #allocation5 [shape = 'u8[16384]{0}', space=vmem, size = 0x4000, scoped, tag = 'input window, operand 1, single buffered']
    #allocation6 [shape = 's32[1]{0}', space=sflag, size = 0x4, scoped, tag = 'scoped memory for tpu_custom_call.1']
    #allocation7 [shape = 'u8[16384]{0}', space=vmem, size = 0x4000, scoped, tag = 'input window, operand 2, single buffered']
    #allocation8 [shape = 'u8[8192]{0}', space=vmem, size = 0x2000, scoped, tag = 'input window, operand 3, single buffered']
    #allocation9 [shape = 's32[1]{0}', space=sflag, size = 0x4, scoped, tag = 'scoped memory for tpu_custom_call.1']
    #allocation10 [shape = 'u8[8192]{0}', space=vmem, size = 0x2000, scoped, tag = 'input window, operand 4, single buffered']
    #allocation11 [shape = 'u8[2048]{0}', space=vmem, size = 0x800, scoped, tag = 'input window, operand 5, single buffered']
    #allocation12 [shape = 's32[1]{0}', space=sflag, size = 0x4, scoped, tag = 'scoped memory for tpu_custom_call.1']
    #allocation13 [shape = 'u8[2048]{0}', space=vmem, size = 0x800, scoped, tag = 'input window, operand 6, single buffered']
    #allocation14 [shape = 'u8[2048]{0}', space=vmem, size = 0x800, scoped, tag = 'input window, operand 7, single buffered']
    #allocation15 [shape = 's32[1]{0}', space=sflag, size = 0x4, scoped, tag = 'scoped memory for tpu_custom_call.1']
    #allocation16 [shape = 'u8[8192]{0}', space=vmem, size = 0x2000, scoped, tag = 'input window, operand 8, single buffered']
    #allocation17 [shape = 'u8[8192]{0}', space=vmem, size = 0x2000, scoped, tag = 'input window, operand 9, single buffered']
    #allocation18 [shape = 's32[1]{0}', space=sflag, size = 0x4, scoped, tag = 'scoped memory for tpu_custom_call.1']
    #allocation19 [shape = 'u8[512]{0}', space=vmem, size = 0x400, scoped, tag = 'input window, operand 10, single buffered']
    #allocation20 [shape = 'u8[32768]{0}', space=vmem, size = 0x8000, scoped, tag = 'input window, operand 11, single buffered']
    #allocation21 [shape = 's32[1]{0}', space=sflag, size = 0x4, scoped, tag = 'scoped memory for tpu_custom_call.1']
    #allocation22 [shape = 'u8[512]{0}', space=vmem, size = 0x400, scoped, tag = 'input window, operand 12, single buffered']
    #allocation23 [shape = 'u8[512]{0}', space=vmem, size = 0x400, scoped, tag = 'input window, operand 13, single buffered']
    #allocation24 [shape = 's32[1]{0}', space=sflag, size = 0x4, scoped, tag = 'scoped memory for tpu_custom_call.1']
    #allocation25 [shape = 'u8[512]{0}', space=vmem, size = 0x400, scoped, tag = 'input window, operand 14, single buffered']
    #allocation26 [shape = 'u8[512]{0}', space=vmem, size = 0x400, scoped, tag = 'input window, operand 15, single buffered']
    #allocation27 [shape = 's32[1]{0}', space=sflag, size = 0x4, scoped, tag = 'scoped memory for tpu_custom_call.1']
    #allocation28 [shape = 'u8[512]{0}', space=vmem, size = 0x400, scoped, tag = 'input window, operand 16, single buffered']
    #allocation29 [shape = 'u8[8192]{0}', space=vmem, size = 0x2000, scoped, tag = 'output window, operand 0, single buffered']
    %22 = vsyncpa [#allocation3], 0
    %23 = vsyncpa [#allocation6], 0
    %24 = vsyncpa [#allocation9], 0
    %25 = vsyncpa [#allocation12], 0
    %26 = vsyncpa [#allocation15], 0
    %27 = vsyncpa [#allocation18], 0
    %28 = vsyncpa [#allocation21], 0
    %29 = vsyncpa [#allocation24], 0
    %30 = vsyncpa [#allocation27], 0
    %31 = vsyncpa [#allocation4], 0
    // Predicated region
    $region2: #{tpu_custom_call.1} parent=1 // pred_check
      _
    $region3: #{tpu_custom_call.1} parent=1 // pred_check_branch
      %33 = sbr.rel (0) target = $region5
    $region4: #{tpu_custom_call.1} parent=1 // pred_region
      %s35 = ssub.s32 512, 512
      %36 = vsyncadd [#allocation3], %s35
      %s37 = sshll.u32 [#allocation2], 4
      %s38 = int_to_ptr.vmem [resolvable:$true] %s37
      %43 = dma.hbm_to_vmem [thread:$0]  %s0, 512, %s38, [#allocation3], 64, 64, 4
    $region5: #{tpu_custom_call.1} parent=1 // pred_fallthru
      _
    // Predicated region
    $region6: #{tpu_custom_call.1} parent=1 // pred_check
      _
    $region7: #{tpu_custom_call.1} parent=1 // pred_check_branch
      %45 = sbr.rel (0) target = $region9
    $region8: #{tpu_custom_call.1} parent=1 // pred_region
      %s47 = ssub.s32 512, 512
      %48 = vsyncadd [#allocation6], %s47
      %s49 = sshll.u32 [#allocation5], 4
      %s50 = int_to_ptr.vmem [resolvable:$true] %s49
      %55 = dma.hbm_to_vmem [thread:$0]  %s1, 512, %s50, [#allocation6], 64, 64, 4
    $region9: #{tpu_custom_call.1} parent=1 // pred_fallthru
      _
    // Predicated region
    $region10: #{tpu_custom_call.1} parent=1 // pred_check
      _
    $region11: #{tpu_custom_call.1} parent=1 // pred_check_branch
      %57 = sbr.rel (0) target = $region13
    $region12: #{tpu_custom_call.1} parent=1 // pred_region
      %s59 = ssub.s32 512, 512
      %60 = vsyncadd [#allocation6], %s59
      %s61 = sshll.u32 [#allocation7], 4
      %s62 = int_to_ptr.vmem [resolvable:$true] %s61
      %67 = dma.hbm_to_vmem [thread:$0]  %s2, 512, %s62, [#allocation6], 64, 64, 4
    $region13: #{tpu_custom_call.1} parent=1 // pred_fallthru
      _
    // Predicated region
    $region14: #{tpu_custom_call.1} parent=1 // pred_check
      _
    $region15: #{tpu_custom_call.1} parent=1 // pred_check_branch
      %69 = sbr.rel (0) target = $region17
    $region16: #{tpu_custom_call.1} parent=1 // pred_region
      %s71 = ssub.s32 256, 256
      %72 = vsyncadd [#allocation9], %s71
      %s73 = sshll.u32 [#allocation8], 4
      %s74 = int_to_ptr.vmem [resolvable:$true] %s73
      %79 = dma.hbm_to_vmem [thread:$0]  %s3, 256, %s74, [#allocation9], 128, 128, 8
    $region17: #{tpu_custom_call.1} parent=1 // pred_fallthru
      _
    // Predicated region
    $region18: #{tpu_custom_call.1} parent=1 // pred_check
      _
    $region19: #{tpu_custom_call.1} parent=1 // pred_check_branch
      %81 = sbr.rel (0) target = $region21
    $region20: #{tpu_custom_call.1} parent=1 // pred_region
      %s83 = ssub.s32 256, 256
      %84 = vsyncadd [#allocation9], %s83
      %s85 = sshll.u32 [#allocation10], 4
      %s86 = int_to_ptr.vmem [resolvable:$true] %s85
      %91 = dma.hbm_to_vmem [thread:$0]  %s4, 256, %s86, [#allocation9], 128, 128, 8
    $region21: #{tpu_custom_call.1} parent=1 // pred_fallthru
      _
    // Predicated region
    $region22: #{tpu_custom_call.1} parent=1 // pred_check
      _
    $region23: #{tpu_custom_call.1} parent=1 // pred_check_branch
      %93 = sbr.rel (0) target = $region25
    $region24: #{tpu_custom_call.1} parent=1 // pred_region
      %s95 = ssub.s32 64, 64
      %96 = vsyncadd [#allocation12], %s95
      %s98 = sshll.u32 [#allocation11], 4
      %s99 = int_to_ptr.vmem [resolvable:$true] %s98
      %101 = dma.hbm_to_vmem [thread:$0]  %s5, 64, %s99, [#allocation12]
    $region25: #{tpu_custom_call.1} parent=1 // pred_fallthru
      _
    // Predicated region
    $region26: #{tpu_custom_call.1} parent=1 // pred_check
      _
    $region27: #{tpu_custom_call.1} parent=1 // pred_check_branch
      %103 = sbr.rel (0) target = $region29
    $region28: #{tpu_custom_call.1} parent=1 // pred_region
      %s105 = ssub.s32 64, 64
      %106 = vsyncadd [#allocation12], %s105
      %s108 = sshll.u32 [#allocation13], 4
      %s109 = int_to_ptr.vmem [resolvable:$true] %s108
      %111 = dma.hbm_to_vmem [thread:$0]  %s6, 64, %s109, [#allocation12]
    $region29: #{tpu_custom_call.1} parent=1 // pred_fallthru
      _
    // Predicated region
    $region30: #{tpu_custom_call.1} parent=1 // pred_check
      _
    $region31: #{tpu_custom_call.1} parent=1 // pred_check_branch
      %113 = sbr.rel (0) target = $region33
    $region32: #{tpu_custom_call.1} parent=1 // pred_region
      %s115 = ssub.s32 64, 64
      %116 = vsyncadd [#allocation15], %s115
      %s118 = sshll.u32 [#allocation14], 4
      %s119 = int_to_ptr.vmem [resolvable:$true] %s118
      %121 = dma.hbm_to_vmem [thread:$0]  %s7, 64, %s119, [#allocation15]
    $region33: #{tpu_custom_call.1} parent=1 // pred_fallthru
      _
    // Predicated region
    $region34: #{tpu_custom_call.1} parent=1 // pred_check
      _
    $region35: #{tpu_custom_call.1} parent=1 // pred_check_branch
      %123 = sbr.rel (0) target = $region37
    $region36: #{tpu_custom_call.1} parent=1 // pred_region
      %s125 = ssub.s32 256, 256
      %126 = vsyncadd [#allocation15], %s125
      %s127 = sshll.u32 [#allocation16], 4
      %s128 = int_to_ptr.vmem [resolvable:$true] %s127
      %133 = dma.hbm_to_vmem [thread:$0]  %s8, 256, %s128, [#allocation15], 64, 64, 4
    $region37: #{tpu_custom_call.1} parent=1 // pred_fallthru
      _
    // Predicated region
    $region38: #{tpu_custom_call.1} parent=1 // pred_check
      _
    $region39: #{tpu_custom_call.1} parent=1 // pred_check_branch
      %135 = sbr.rel (0) target = $region41
    $region40: #{tpu_custom_call.1} parent=1 // pred_region
      %s137 = ssub.s32 256, 256
      %138 = vsyncadd [#allocation18], %s137
      %s139 = sshll.u32 [#allocation17], 4
      %s140 = int_to_ptr.vmem [resolvable:$true] %s139
      %145 = dma.hbm_to_vmem [thread:$0]  %s9, 256, %s140, [#allocation18], 64, 64, 4
    $region41: #{tpu_custom_call.1} parent=1 // pred_fallthru
      _
    // Predicated region
    $region42: #{tpu_custom_call.1} parent=1 // pred_check
      _
    $region43: #{tpu_custom_call.1} parent=1 // pred_check_branch
      %147 = sbr.rel (0) target = $region45
    $region44: #{tpu_custom_call.1} parent=1 // pred_region
      %s149 = ssub.s32 16, 16
      %150 = vsyncadd [#allocation18], %s149
      %s152 = sshll.u32 [#allocation19], 4
      %s153 = int_to_ptr.vmem [resolvable:$true] %s152
      %155 = dma.hbm_to_vmem [thread:$0]  %s10, 16, %s153, [#allocation18]
    $region45: #{tpu_custom_call.1} parent=1 // pred_fallthru
      _
    // Predicated region
    $region46: #{tpu_custom_call.1} parent=1 // pred_check
      _
    $region47: #{tpu_custom_call.1} parent=1 // pred_check_branch
      %157 = sbr.rel (0) target = $region49
    $region48: #{tpu_custom_call.1} parent=1 // pred_region
      %s159 = ssub.s32 1024, 1024
      %160 = vsyncadd [#allocation21], %s159
      %s161 = sshll.u32 [#allocation20], 4
      %s162 = int_to_ptr.vmem [resolvable:$true] %s161
      %167 = dma.hbm_to_vmem [thread:$0]  %s11, 1024, %s162, [#allocation21], 64, 64, 4
    $region49: #{tpu_custom_call.1} parent=1 // pred_fallthru
      _
    // Predicated region
    $region50: #{tpu_custom_call.1} parent=1 // pred_check
      _
    $region51: #{tpu_custom_call.1} parent=1 // pred_check_branch
      %169 = sbr.rel (0) target = $region53
    $region52: #{tpu_custom_call.1} parent=1 // pred_region
      %s171 = ssub.s32 16, 16
      %172 = vsyncadd [#allocation21], %s171
      %s174 = sshll.u32 [#allocation22], 4
      %s175 = int_to_ptr.vmem [resolvable:$true] %s174
      %177 = dma.hbm_to_vmem [thread:$0]  %s12, 16, %s175, [#allocation21]
    $region53: #{tpu_custom_call.1} parent=1 // pred_fallthru
      _
    // Predicated region
    $region54: #{tpu_custom_call.1} parent=1 // pred_check
      _
    $region55: #{tpu_custom_call.1} parent=1 // pred_check_branch
      %179 = sbr.rel (0) target = $region57
    $region56: #{tpu_custom_call.1} parent=1 // pred_region
      %s181 = ssub.s32 16, 16
      %182 = vsyncadd [#allocation24], %s181
      %s184 = sshll.u32 [#allocation23], 4
      %s185 = int_to_ptr.vmem [resolvable:$true] %s184
      %187 = dma.hbm_to_vmem [thread:$0]  %s13, 16, %s185, [#allocation24]
    $region57: #{tpu_custom_call.1} parent=1 // pred_fallthru
      _
    // Predicated region
    $region58: #{tpu_custom_call.1} parent=1 // pred_check
      _
    $region59: #{tpu_custom_call.1} parent=1 // pred_check_branch
      %189 = sbr.rel (0) target = $region61
    $region60: #{tpu_custom_call.1} parent=1 // pred_region
      %s191 = ssub.s32 16, 16
      %192 = vsyncadd [#allocation24], %s191
      %s194 = sshll.u32 [#allocation25], 4
      %s195 = int_to_ptr.vmem [resolvable:$true] %s194
      %197 = dma.hbm_to_vmem [thread:$0]  %s14, 16, %s195, [#allocation24]
    $region61: #{tpu_custom_call.1} parent=1 // pred_fallthru
      _
    // Predicated region
    $region62: #{tpu_custom_call.1} parent=1 // pred_check
      _
    $region63: #{tpu_custom_call.1} parent=1 // pred_check_branch
      %199 = sbr.rel (0) target = $region65
    $region64: #{tpu_custom_call.1} parent=1 // pred_region
      %s201 = ssub.s32 16, 16
      %202 = vsyncadd [#allocation27], %s201
      %s204 = sshll.u32 [#allocation26], 4
      %s205 = int_to_ptr.vmem [resolvable:$true] %s204
      %207 = dma.hbm_to_vmem [thread:$0]  %s15, 16, %s205, [#allocation27]
    $region65: #{tpu_custom_call.1} parent=1 // pred_fallthru
      _
    // Predicated region
    $region66: #{tpu_custom_call.1} parent=1 // pred_check
      _
    $region67: #{tpu_custom_call.1} parent=1 // pred_check_branch
      %209 = sbr.rel (0) target = $region69
    $region68: #{tpu_custom_call.1} parent=1 // pred_region
      %s211 = ssub.s32 16, 16
      %212 = vsyncadd [#allocation27], %s211
      %s214 = sshll.u32 [#allocation28], 4
      %s215 = int_to_ptr.vmem [resolvable:$true] %s214
      %217 = dma.hbm_to_vmem [thread:$0]  %s16, 16, %s215, [#allocation27]
    $region69: #{tpu_custom_call.1} parent=1 // pred_fallthru
      _
    // Predicated region
    $region70: #{tpu_custom_call.1} parent=1 // pred_check
      _
    $region71: #{tpu_custom_call.1} parent=1 // pred_check_branch
      %219 = sbr.rel (0) target = $region73
    $region72: #{tpu_custom_call.1} parent=1 // pred_region
      %220 = dma.done [#allocation3], 512
    $region73: #{tpu_custom_call.1} parent=1 // pred_fallthru
      _
    // Predicated region
    $region74: #{tpu_custom_call.1} parent=1 // pred_check
      _
    $region75: #{tpu_custom_call.1} parent=1 // pred_check_branch
      %222 = sbr.rel (0) target = $region77
    $region76: #{tpu_custom_call.1} parent=1 // pred_region
      %223 = dma.done [#allocation6], 512
    $region77: #{tpu_custom_call.1} parent=1 // pred_fallthru
      _
    // Predicated region
    $region78: #{tpu_custom_call.1} parent=1 // pred_check
      _
    $region79: #{tpu_custom_call.1} parent=1 // pred_check_branch
      %225 = sbr.rel (0) target = $region81
    $region80: #{tpu_custom_call.1} parent=1 // pred_region
      %226 = dma.done [#allocation6], 512
    $region81: #{tpu_custom_call.1} parent=1 // pred_fallthru
      _
    // Predicated region
    $region82: #{tpu_custom_call.1} parent=1 // pred_check
      _
    $region83: #{tpu_custom_call.1} parent=1 // pred_check_branch
      %228 = sbr.rel (0) target = $region85
    $region84: #{tpu_custom_call.1} parent=1 // pred_region
      %229 = dma.done [#allocation9], 256
    $region85: #{tpu_custom_call.1} parent=1 // pred_fallthru
      _
    // Predicated region
    $region86: #{tpu_custom_call.1} parent=1 // pred_check
      _
    $region87: #{tpu_custom_call.1} parent=1 // pred_check_branch
      %231 = sbr.rel (0) target = $region89
    $region88: #{tpu_custom_call.1} parent=1 // pred_region
      %232 = dma.done [#allocation9], 256
    $region89: #{tpu_custom_call.1} parent=1 // pred_fallthru
      _
    // Predicated region
    $region90: #{tpu_custom_call.1} parent=1 // pred_check
      _
    $region91: #{tpu_custom_call.1} parent=1 // pred_check_branch
      %234 = sbr.rel (0) target = $region93
    $region92: #{tpu_custom_call.1} parent=1 // pred_region
      %235 = dma.done [#allocation12], 64
    $region93: #{tpu_custom_call.1} parent=1 // pred_fallthru
      _
    // Predicated region
    $region94: #{tpu_custom_call.1} parent=1 // pred_check
      _
    $region95: #{tpu_custom_call.1} parent=1 // pred_check_branch
      %237 = sbr.rel (0) target = $region97
    $region96: #{tpu_custom_call.1} parent=1 // pred_region
      %238 = dma.done [#allocation12], 64
    $region97: #{tpu_custom_call.1} parent=1 // pred_fallthru
      _
    // Predicated region
    $region98: #{tpu_custom_call.1} parent=1 // pred_check
      _
    $region99: #{tpu_custom_call.1} parent=1 // pred_check_branch
      %240 = sbr.rel (0) target = $region101
    $region100: #{tpu_custom_call.1} parent=1 // pred_region
      %241 = dma.done [#allocation15], 64
    $region101: #{tpu_custom_call.1} parent=1 // pred_fallthru
      _
    // Predicated region
    $region102: #{tpu_custom_call.1} parent=1 // pred_check
      _
    $region103: #{tpu_custom_call.1} parent=1 // pred_check_branch
      %243 = sbr.rel (0) target = $region105
    $region104: #{tpu_custom_call.1} parent=1 // pred_region
      %244 = dma.done [#allocation15], 256
    $region105: #{tpu_custom_call.1} parent=1 // pred_fallthru
      _
    // Predicated region
    $region106: #{tpu_custom_call.1} parent=1 // pred_check
      _
    $region107: #{tpu_custom_call.1} parent=1 // pred_check_branch
      %246 = sbr.rel (0) target = $region109
    $region108: #{tpu_custom_call.1} parent=1 // pred_region
      %247 = dma.done [#allocation18], 256
    $region109: #{tpu_custom_call.1} parent=1 // pred_fallthru
      _
    // Predicated region
    $region110: #{tpu_custom_call.1} parent=1 // pred_check
      _
    $region111: #{tpu_custom_call.1} parent=1 // pred_check_branch
      %249 = sbr.rel (0) target = $region113
    $region112: #{tpu_custom_call.1} parent=1 // pred_region
      %250 = dma.done [#allocation18], 16
    $region113: #{tpu_custom_call.1} parent=1 // pred_fallthru
      _
    // Predicated region
    $region114: #{tpu_custom_call.1} parent=1 // pred_check
      _
    $region115: #{tpu_custom_call.1} parent=1 // pred_check_branch
      %252 = sbr.rel (0) target = $region117
    $region116: #{tpu_custom_call.1} parent=1 // pred_region
      %253 = dma.done [#allocation21], 1024
    $region117: #{tpu_custom_call.1} parent=1 // pred_fallthru
      _
    // Predicated region
    $region118: #{tpu_custom_call.1} parent=1 // pred_check
      _
    $region119: #{tpu_custom_call.1} parent=1 // pred_check_branch
      %255 = sbr.rel (0) target = $region121
    $region120: #{tpu_custom_call.1} parent=1 // pred_region
      %256 = dma.done [#allocation21], 16
    $region121: #{tpu_custom_call.1} parent=1 // pred_fallthru
      _
    // Predicated region
    $region122: #{tpu_custom_call.1} parent=1 // pred_check
      _
    $region123: #{tpu_custom_call.1} parent=1 // pred_check_branch
      %258 = sbr.rel (0) target = $region125
    $region124: #{tpu_custom_call.1} parent=1 // pred_region
      %259 = dma.done [#allocation24], 16
    $region125: #{tpu_custom_call.1} parent=1 // pred_fallthru
      _
    // Predicated region
    $region126: #{tpu_custom_call.1} parent=1 // pred_check
      _
    $region127: #{tpu_custom_call.1} parent=1 // pred_check_branch
      %261 = sbr.rel (0) target = $region129
    $region128: #{tpu_custom_call.1} parent=1 // pred_region
      %262 = dma.done [#allocation24], 16
    $region129: #{tpu_custom_call.1} parent=1 // pred_fallthru
      _
    // Predicated region
    $region130: #{tpu_custom_call.1} parent=1 // pred_check
      _
    $region131: #{tpu_custom_call.1} parent=1 // pred_check_branch
      %264 = sbr.rel (0) target = $region133
    $region132: #{tpu_custom_call.1} parent=1 // pred_region
      %265 = dma.done [#allocation27], 16
    $region133: #{tpu_custom_call.1} parent=1 // pred_fallthru
      _
    // Predicated region
    $region134: #{tpu_custom_call.1} parent=1 // pred_check
      _
    $region135: #{tpu_custom_call.1} parent=1 // pred_check_branch
      %267 = sbr.rel (0) target = $region137
    $region136: #{tpu_custom_call.1} parent=1 // pred_region
      %268 = dma.done [#allocation27], 16
    $region137: #{tpu_custom_call.1} parent=1 // pred_fallthru
      _
    %v270 = vld [vmem:[#allocation2] sm:$0xf]
    %v271 = vld [vmem:[#allocation2 + $0x4] sm:$0xf]
    %v272 = vld [vmem:[#allocation2 + $0x8] sm:$0xf]
    %v273 = vld [vmem:[#allocation2 + $0xc] sm:$0xf]
    %v274 = vld [vmem:[#allocation2 + $0x10] sm:$0xf]
    %v275 = vld [vmem:[#allocation2 + $0x14] sm:$0xf]
    %v276 = vld [vmem:[#allocation2 + $0x18] sm:$0xf]
    %v277 = vld [vmem:[#allocation2 + $0x1c] sm:$0xf]
    %v278 = vld [vmem:[#allocation5] sm:$0xf]
    %v279 = vld [vmem:[#allocation5 + $0x4] sm:$0xf]
    %v280 = vld [vmem:[#allocation5 + $0x8] sm:$0xf]
    %v281 = vld [vmem:[#allocation5 + $0xc] sm:$0xf]
    %v282 = vld [vmem:[#allocation5 + $0x10] sm:$0xf]
    %v283 = vld [vmem:[#allocation5 + $0x14] sm:$0xf]
    %v284 = vld [vmem:[#allocation5 + $0x18] sm:$0xf]
    %v285 = vld [vmem:[#allocation5 + $0x1c] sm:$0xf]
    %v286 = vld [vmem:[#allocation7] sm:$0xf]
    %v287 = vld [vmem:[#allocation7 + $0x4] sm:$0xf]
    %v288 = vld [vmem:[#allocation7 + $0x8] sm:$0xf]
    %v289 = vld [vmem:[#allocation7 + $0xc] sm:$0xf]
    %v290 = vld [vmem:[#allocation7 + $0x10] sm:$0xf]
    %v291 = vld [vmem:[#allocation7 + $0x14] sm:$0xf]
    %v292 = vld [vmem:[#allocation7 + $0x18] sm:$0xf]
    %v293 = vld [vmem:[#allocation7 + $0x1c] sm:$0xf]
    %v294 = vld [vmem:[#allocation11] sm:$0xf]
    %v303 = vunpack.c.l.b16 %v270
    %v304 = vunpack.c.l.b16 %v271
    %v305 = vunpack.c.l.b16 %v272
    %v306 = vunpack.c.l.b16 %v273
    %v307 = vunpack.c.l.b16 %v274
    %v308 = vunpack.c.l.b16 %v275
    %v309 = vunpack.c.l.b16 %v276
    %v310 = vunpack.c.l.b16 %v277
    %v311 = vpack.c.b16 %v304, %v303
    %v312 = vpack.c.b16 %v306, %v305
    %v313 = vpack.c.b16 %v308, %v307
    %v314 = vpack.c.b16 %v310, %v309
    %vm315 = vcmask 64512
    %v317 = vsel %vm315, %v311, 0
    %v320 = vsel %vm315, %v312, 0
    %v323 = vsel %vm315, %v313, 0
    %v326 = vsel %vm315, %v314, 0
    %vm328 = vcmask 1043456
    %v330 = vsel %vm328, %v294, 0
    %332 = vmatprep.subr.bf16.mxu0 0
    %333 = vmatpush1.bf16.msra.mxu0 %v330
    %334 = vmatprep.subr.bf16.mxu0 0
    %335 = vmatpush1.bf16.msra.mxu0 0
    %336 = vmatprep.subr.bf16.mxu0 0
    %337 = vmatpush1.bf16.msra.mxu0 0
    %338 = vmatprep.subr.bf16.mxu0 0
    %339 = vmatpush1.bf16.msra.mxu0 0
    %340 = vmatprep.subr.bf16.mxu0 0
    %341 = vmatpush1.bf16.msra.mxu0 0
    %342 = vmatprep.subr.bf16.mxu0 0
    %343 = vmatpush1.bf16.msra.mxu0 0
    %344 = vmatprep.subr.bf16.mxu0 0
    %345 = vmatpush1.bf16.msra.mxu0 0
    %346 = vmatprep.subr.bf16.mxu0 0
    %347 = vmatpush1.bf16.msra.mxu0 0
    %348 = vmatprep.subr.bf16.mxu0 0
    %349 = vmatpush1.bf16.msra.mxu0 0
    %350 = vmatprep.subr.bf16.mxu0 0
    %351 = vmatpush1.bf16.msra.mxu0 0
    %352 = vmatprep.subr.bf16.mxu0 0
    %353 = vmatpush1.bf16.msra.mxu0 0
    %354 = vmatprep.subr.bf16.mxu0 0
    %355 = vmatpush1.bf16.msra.mxu0 0
    %356 = vmatprep.subr.bf16.mxu0 0
    %357 = vmatpush1.bf16.msra.mxu0 0
    %358 = vmatprep.subr.bf16.mxu0 0
    %359 = vmatpush1.bf16.msra.mxu0 0
    %360 = vmatprep.subr.bf16.mxu0 0
    %361 = vmatpush1.bf16.msra.mxu0 0
    %362 = vmatprep.subr.bf16.mxu0 0
    %363 = vmatpush1.bf16.msra.mxu0 0
    %364 = vmatprep.mubr.bf16.mxu0 0
    %365 = vmatmul.mubr.bf16.gmra.mrb[0].mxu0 %v317
    %v366 = vpop.f32.mrb[0].mxu0
    %v367 = vadd.f32 0.0, %v366
    %v368 = vpop.f32.mrb[0].mxu0
    %v369 = vpop.f32.mrb[0].mxu0
    %v370 = vadd.f32 0.0, %v369
    %v371 = vpop.f32.mrb[0].mxu0
    %372 = vmatprep.mubr.bf16.mxu0 0
    %373 = vmatmul.mubr.bf16.gmra.mrb[0].mxu0 %v320
    %v374 = vpop.f32.mrb[0].mxu0
    %v375 = vadd.f32 0.0, %v374
    %v376 = vpop.f32.mrb[0].mxu0
    %v377 = vpop.f32.mrb[0].mxu0
    %v378 = vadd.f32 0.0, %v377
    %v379 = vpop.f32.mrb[0].mxu0
    %380 = vmatprep.mubr.bf16.mxu0 0
    %381 = vmatmul.mubr.bf16.gmra.mrb[0].mxu0 %v323
    %v382 = vpop.f32.mrb[0].mxu0
    %v383 = vadd.f32 0.0, %v382
    %v384 = vpop.f32.mrb[0].mxu0
    %v385 = vpop.f32.mrb[0].mxu0
    %v386 = vadd.f32 0.0, %v385
    %v387 = vpop.f32.mrb[0].mxu0
    %388 = vmatprep.mubr.bf16.mxu0 0
    %389 = vmatmul.mubr.bf16.gmra.mrb[0].mxu0 %v326
    %v390 = vpop.f32.mrb[0].mxu0
    %v391 = vadd.f32 0.0, %v390
    %v392 = vpop.f32.mrb[0].mxu0
    %v393 = vpop.f32.mrb[0].mxu0
    %v394 = vadd.f32 0.0, %v393
    %v395 = vpop.f32.mrb[0].mxu0
    %396 = vdwg.mxu0
    %v397 = vld [vmem:[#allocation13] sm:$0xf]
    %v406 = vunpack.c.l.b16 %v278
    %v407 = vunpack.c.l.b16 %v279
    %v408 = vunpack.c.l.b16 %v280
    %v409 = vunpack.c.l.b16 %v281
    %v410 = vunpack.c.l.b16 %v282
    %v411 = vunpack.c.l.b16 %v283
    %v412 = vunpack.c.l.b16 %v284
    %v413 = vunpack.c.l.b16 %v285
    %v414 = vpack.c.b16 %v407, %v406
    %v415 = vpack.c.b16 %v409, %v408
    %v416 = vpack.c.b16 %v411, %v410
    %v417 = vpack.c.b16 %v413, %v412
    %v419 = vsel %vm315, %v414, 0
    %v422 = vsel %vm315, %v415, 0
    %v425 = vsel %vm315, %v416, 0
    %v428 = vsel %vm315, %v417, 0
    %v431 = vsel %vm328, %v397, 0
    %433 = vmatprep.subr.bf16.mxu0 0
    %434 = vmatpush1.bf16.msra.mxu0 %v431
    %435 = vmatprep.subr.bf16.mxu0 0
    %436 = vmatpush1.bf16.msra.mxu0 0
    %437 = vmatprep.subr.bf16.mxu0 0
    %438 = vmatpush1.bf16.msra.mxu0 0
    %439 = vmatprep.subr.bf16.mxu0 0
    %440 = vmatpush1.bf16.msra.mxu0 0
    %441 = vmatprep.subr.bf16.mxu0 0
    %442 = vmatpush1.bf16.msra.mxu0 0
    %443 = vmatprep.subr.bf16.mxu0 0
    %444 = vmatpush1.bf16.msra.mxu0 0
    %445 = vmatprep.subr.bf16.mxu0 0
    %446 = vmatpush1.bf16.msra.mxu0 0
    %447 = vmatprep.subr.bf16.mxu0 0
    %448 = vmatpush1.bf16.msra.mxu0 0
    %449 = vmatprep.subr.bf16.mxu0 0
    %450 = vmatpush1.bf16.msra.mxu0 0
    %451 = vmatprep.subr.bf16.mxu0 0
    %452 = vmatpush1.bf16.msra.mxu0 0
    %453 = vmatprep.subr.bf16.mxu0 0
    %454 = vmatpush1.bf16.msra.mxu0 0
    %455 = vmatprep.subr.bf16.mxu0 0
    %456 = vmatpush1.bf16.msra.mxu0 0
    %457 = vmatprep.subr.bf16.mxu0 0
    %458 = vmatpush1.bf16.msra.mxu0 0
    %459 = vmatprep.subr.bf16.mxu0 0
    %460 = vmatpush1.bf16.msra.mxu0 0
    %461 = vmatprep.subr.bf16.mxu0 0
    %462 = vmatpush1.bf16.msra.mxu0 0
    %463 = vmatprep.subr.bf16.mxu0 0
    %464 = vmatpush1.bf16.msra.mxu0 0
    %465 = vmatprep.mubr.bf16.mxu0 0
    %466 = vmatmul.mubr.bf16.gmra.mrb[0].mxu0 %v419
    %v467 = vpop.f32.mrb[0].mxu0
    %v468 = vadd.f32 0.0, %v467
    %v469 = vpop.f32.mrb[0].mxu0
    %v470 = vpop.f32.mrb[0].mxu0
    %v471 = vadd.f32 0.0, %v470
    %v472 = vpop.f32.mrb[0].mxu0
    %473 = vmatprep.mubr.bf16.mxu0 0
    %474 = vmatmul.mubr.bf16.gmra.mrb[0].mxu0 %v422
    %v475 = vpop.f32.mrb[0].mxu0
    %v476 = vadd.f32 0.0, %v475
    %v477 = vpop.f32.mrb[0].mxu0
    %v478 = vpop.f32.mrb[0].mxu0
    %v479 = vadd.f32 0.0, %v478
    %v480 = vpop.f32.mrb[0].mxu0
    %481 = vmatprep.mubr.bf16.mxu0 0
    %482 = vmatmul.mubr.bf16.gmra.mrb[0].mxu0 %v425
    %v483 = vpop.f32.mrb[0].mxu0
    %v484 = vadd.f32 0.0, %v483
    %v485 = vpop.f32.mrb[0].mxu0
    %v486 = vpop.f32.mrb[0].mxu0
    %v487 = vadd.f32 0.0, %v486
    %v488 = vpop.f32.mrb[0].mxu0
    %489 = vmatprep.mubr.bf16.mxu0 0
    %490 = vmatmul.mubr.bf16.gmra.mrb[0].mxu0 %v428
    %v491 = vpop.f32.mrb[0].mxu0
    %v492 = vadd.f32 0.0, %v491
    %v493 = vpop.f32.mrb[0].mxu0
    %v494 = vpop.f32.mrb[0].mxu0
    %v495 = vadd.f32 0.0, %v494
    %v496 = vpop.f32.mrb[0].mxu0
    %497 = vdwg.mxu0
    %v498 = vld [vmem:[#allocation14] sm:$0xf]
    %v507 = vunpack.c.l.b16 %v286
    %v508 = vunpack.c.l.b16 %v287
    %v509 = vunpack.c.l.b16 %v288
    %v510 = vunpack.c.l.b16 %v289
    %v511 = vunpack.c.l.b16 %v290
    %v512 = vunpack.c.l.b16 %v291
    %v513 = vunpack.c.l.b16 %v292
    %v514 = vunpack.c.l.b16 %v293
    %v515 = vpack.c.b16 %v508, %v507
    %v516 = vpack.c.b16 %v510, %v509
    %v517 = vpack.c.b16 %v512, %v511
    %v518 = vpack.c.b16 %v514, %v513
    %v520 = vsel %vm315, %v515, 0
    %v523 = vsel %vm315, %v516, 0
    %v526 = vsel %vm315, %v517, 0
    %v529 = vsel %vm315, %v518, 0
    %v532 = vsel %vm328, %v498, 0
    %534 = vmatprep.subr.bf16.mxu0 0
    %535 = vmatpush1.bf16.msra.mxu0 %v532
    %536 = vmatprep.subr.bf16.mxu0 0
    %537 = vmatpush1.bf16.msra.mxu0 0
    %538 = vmatprep.subr.bf16.mxu0 0
    %539 = vmatpush1.bf16.msra.mxu0 0
    %540 = vmatprep.subr.bf16.mxu0 0
    %541 = vmatpush1.bf16.msra.mxu0 0
    %542 = vmatprep.subr.bf16.mxu0 0
    %543 = vmatpush1.bf16.msra.mxu0 0
    %544 = vmatprep.subr.bf16.mxu0 0
    %545 = vmatpush1.bf16.msra.mxu0 0
    %546 = vmatprep.subr.bf16.mxu0 0
    %547 = vmatpush1.bf16.msra.mxu0 0
    %548 = vmatprep.subr.bf16.mxu0 0
    %549 = vmatpush1.bf16.msra.mxu0 0
    %550 = vmatprep.subr.bf16.mxu0 0
    %551 = vmatpush1.bf16.msra.mxu0 0
    %552 = vmatprep.subr.bf16.mxu0 0
    %553 = vmatpush1.bf16.msra.mxu0 0
    %554 = vmatprep.subr.bf16.mxu0 0
    %555 = vmatpush1.bf16.msra.mxu0 0
    %556 = vmatprep.subr.bf16.mxu0 0
    %557 = vmatpush1.bf16.msra.mxu0 0
    %558 = vmatprep.subr.bf16.mxu0 0
    %559 = vmatpush1.bf16.msra.mxu0 0
    %560 = vmatprep.subr.bf16.mxu0 0
    %561 = vmatpush1.bf16.msra.mxu0 0
    %562 = vmatprep.subr.bf16.mxu0 0
    %563 = vmatpush1.bf16.msra.mxu0 0
    %564 = vmatprep.subr.bf16.mxu0 0
    %565 = vmatpush1.bf16.msra.mxu0 0
    %566 = vmatprep.mubr.bf16.mxu0 0
    %567 = vmatmul.mubr.bf16.gmra.mrb[0].mxu0 %v520
    %v568 = vpop.f32.mrb[0].mxu0
    %v569 = vadd.f32 0.0, %v568
    %v570 = vpop.f32.mrb[0].mxu0
    %v571 = vpop.f32.mrb[0].mxu0
    %v572 = vadd.f32 0.0, %v571
    %v573 = vpop.f32.mrb[0].mxu0
    %574 = vmatprep.mubr.bf16.mxu0 0
    %575 = vmatmul.mubr.bf16.gmra.mrb[0].mxu0 %v523
    %v576 = vpop.f32.mrb[0].mxu0
    %v577 = vadd.f32 0.0, %v576
    %v578 = vpop.f32.mrb[0].mxu0
    %v579 = vpop.f32.mrb[0].mxu0
    %v580 = vadd.f32 0.0, %v579
    %v581 = vpop.f32.mrb[0].mxu0
    %582 = vmatprep.mubr.bf16.mxu0 0
    %583 = vmatmul.mubr.bf16.gmra.mrb[0].mxu0 %v526
    %v584 = vpop.f32.mrb[0].mxu0
    %v585 = vadd.f32 0.0, %v584
    %v586 = vpop.f32.mrb[0].mxu0
    %v587 = vpop.f32.mrb[0].mxu0
    %v588 = vadd.f32 0.0, %v587
    %v589 = vpop.f32.mrb[0].mxu0
    %590 = vmatprep.mubr.bf16.mxu0 0
    %591 = vmatmul.mubr.bf16.gmra.mrb[0].mxu0 %v529
    %v592 = vpop.f32.mrb[0].mxu0
    %v593 = vadd.f32 0.0, %v592
    %v594 = vpop.f32.mrb[0].mxu0
    %v595 = vpop.f32.mrb[0].mxu0
    %v596 = vadd.f32 0.0, %v595
    %v597 = vpop.f32.mrb[0].mxu0
    %598 = vdwg.mxu0
    %v599 = vpack.c.bf16 %v367, %v367
    %v600 = vpack.c.bf16 %v370, %v370
    %v601 = vpack.c.bf16 %v375, %v375
    %v602 = vpack.c.bf16 %v378, %v378
    %v603 = vpack.c.bf16 %v383, %v383
    %v604 = vpack.c.bf16 %v386, %v386
    %v605 = vpack.c.bf16 %v391, %v391
    %v606 = vpack.c.bf16 %v394, %v394
    %v607 = vpack.c.bf16 %v468, %v468
    %v608 = vpack.c.bf16 %v471, %v471
    %v609 = vpack.c.bf16 %v476, %v476
    %v610 = vpack.c.bf16 %v479, %v479
    %v611 = vpack.c.bf16 %v484, %v484
    %v612 = vpack.c.bf16 %v487, %v487
    %v613 = vpack.c.bf16 %v492, %v492
    %v614 = vpack.c.bf16 %v495, %v495
    %v616 = vsel %vm315, %v599, 0
    %v619 = vsel %vm315, %v607, 0
    %621 = vmatprep.subr.bf16.mxu0 0
    %622 = vmatpush1.bf16.xpose.msra.mxu0 %v619
    %623 = vmatprep.subr.bf16.mxu0 0
    %624 = vmatpush1.bf16.xpose.msra.mxu0 0
    %625 = vmatprep.subr.bf16.mxu0 0
    %626 = vmatpush1.bf16.xpose.msra.mxu0 0
    %627 = vmatprep.subr.bf16.mxu0 0
    %628 = vmatpush1.bf16.xpose.msra.mxu0 0
    %629 = vmatprep.subr.bf16.mxu0 0
    %630 = vmatpush1.bf16.xpose.msra.mxu0 0
    %631 = vmatprep.subr.bf16.mxu0 0
    %632 = vmatpush1.bf16.xpose.msra.mxu0 0
    %633 = vmatprep.subr.bf16.mxu0 0
    %634 = vmatpush1.bf16.xpose.msra.mxu0 0
    %635 = vmatprep.subr.bf16.mxu0 0
    %636 = vmatpush1.bf16.xpose.msra.mxu0 0
    %637 = vmatprep.subr.bf16.mxu0 0
    %638 = vmatpush1.bf16.xpose.msra.mxu0 0
    %639 = vmatprep.subr.bf16.mxu0 0
    %640 = vmatpush1.bf16.xpose.msra.mxu0 0
    %641 = vmatprep.subr.bf16.mxu0 0
    %642 = vmatpush1.bf16.xpose.msra.mxu0 0
    %643 = vmatprep.subr.bf16.mxu0 0
    %644 = vmatpush1.bf16.xpose.msra.mxu0 0
    %645 = vmatprep.subr.bf16.mxu0 0
    %646 = vmatpush1.bf16.xpose.msra.mxu0 0
    %647 = vmatprep.subr.bf16.mxu0 0
    %648 = vmatpush1.bf16.xpose.msra.mxu0 0
    %649 = vmatprep.subr.bf16.mxu0 0
    %650 = vmatpush1.bf16.xpose.msra.mxu0 0
    %651 = vmatprep.subr.bf16.mxu0 0
    %652 = vmatpush1.bf16.xpose.msra.mxu0 0
    %653 = vmatprep.mubr.bf16.mxu0 0
    %654 = vmatmul.mubr.bf16.gmra.mrb[0].mxu0 %v616
    %v655 = vpop.f32.mrb[0].mxu0
    %v656 = vadd.f32 0.0, %v655
    %v657 = vpop.f32.mrb[0].mxu0
    %v658 = vpop.f32.mrb[0].mxu0
    %v659 = vpop.f32.mrb[0].mxu0
    %660 = vdwg.mxu0
    %v662 = vsel %vm315, %v600, 0
    %v665 = vsel %vm315, %v608, 0
    %667 = vmatprep.subr.bf16.mxu0 0
    %668 = vmatpush1.bf16.xpose.msra.mxu0 %v665
    %669 = vmatprep.subr.bf16.mxu0 0
    %670 = vmatpush1.bf16.xpose.msra.mxu0 0
    %671 = vmatprep.subr.bf16.mxu0 0
    %672 = vmatpush1.bf16.xpose.msra.mxu0 0
    %673 = vmatprep.subr.bf16.mxu0 0
    %674 = vmatpush1.bf16.xpose.msra.mxu0 0
    %675 = vmatprep.subr.bf16.mxu0 0
    %676 = vmatpush1.bf16.xpose.msra.mxu0 0
    %677 = vmatprep.subr.bf16.mxu0 0
    %678 = vmatpush1.bf16.xpose.msra.mxu0 0
    %679 = vmatprep.subr.bf16.mxu0 0
    %680 = vmatpush1.bf16.xpose.msra.mxu0 0
    %681 = vmatprep.subr.bf16.mxu0 0
    %682 = vmatpush1.bf16.xpose.msra.mxu0 0
    %683 = vmatprep.subr.bf16.mxu0 0
    %684 = vmatpush1.bf16.xpose.msra.mxu0 0
    %685 = vmatprep.subr.bf16.mxu0 0
    %686 = vmatpush1.bf16.xpose.msra.mxu0 0
    %687 = vmatprep.subr.bf16.mxu0 0
    %688 = vmatpush1.bf16.xpose.msra.mxu0 0
    %689 = vmatprep.subr.bf16.mxu0 0
    %690 = vmatpush1.bf16.xpose.msra.mxu0 0
    %691 = vmatprep.subr.bf16.mxu0 0
    %692 = vmatpush1.bf16.xpose.msra.mxu0 0
    %693 = vmatprep.subr.bf16.mxu0 0
    %694 = vmatpush1.bf16.xpose.msra.mxu0 0
    %695 = vmatprep.subr.bf16.mxu0 0
    %696 = vmatpush1.bf16.xpose.msra.mxu0 0
    %697 = vmatprep.subr.bf16.mxu0 0
    %698 = vmatpush1.bf16.xpose.msra.mxu0 0
    %699 = vmatprep.mubr.bf16.mxu0 0
    %700 = vmatmul.mubr.bf16.gmra.mrb[0].mxu0 %v662
    %v701 = vpop.f32.mrb[0].mxu0
    %v702 = vadd.f32 0.0, %v701
    %v703 = vpop.f32.mrb[0].mxu0
    %v704 = vpop.f32.mrb[0].mxu0
    %v705 = vpop.f32.mrb[0].mxu0
    %706 = vdwg.mxu0
    %v708 = vsel %vm315, %v601, 0
    %v711 = vsel %vm315, %v609, 0
    %713 = vmatprep.subr.bf16.mxu0 0
    %714 = vmatpush1.bf16.xpose.msra.mxu0 %v711
    %715 = vmatprep.subr.bf16.mxu0 0
    %716 = vmatpush1.bf16.xpose.msra.mxu0 0
    %717 = vmatprep.subr.bf16.mxu0 0
    %718 = vmatpush1.bf16.xpose.msra.mxu0 0
    %719 = vmatprep.subr.bf16.mxu0 0
    %720 = vmatpush1.bf16.xpose.msra.mxu0 0
    %721 = vmatprep.subr.bf16.mxu0 0
    %722 = vmatpush1.bf16.xpose.msra.mxu0 0
    %723 = vmatprep.subr.bf16.mxu0 0
    %724 = vmatpush1.bf16.xpose.msra.mxu0 0
    %725 = vmatprep.subr.bf16.mxu0 0
    %726 = vmatpush1.bf16.xpose.msra.mxu0 0
    %727 = vmatprep.subr.bf16.mxu0 0
    %728 = vmatpush1.bf16.xpose.msra.mxu0 0
    %729 = vmatprep.subr.bf16.mxu0 0
    %730 = vmatpush1.bf16.xpose.msra.mxu0 0
    %731 = vmatprep.subr.bf16.mxu0 0
    %732 = vmatpush1.bf16.xpose.msra.mxu0 0
    %733 = vmatprep.subr.bf16.mxu0 0
    %734 = vmatpush1.bf16.xpose.msra.mxu0 0
    %735 = vmatprep.subr.bf16.mxu0 0
    %736 = vmatpush1.bf16.xpose.msra.mxu0 0
    %737 = vmatprep.subr.bf16.mxu0 0
    %738 = vmatpush1.bf16.xpose.msra.mxu0 0
    %739 = vmatprep.subr.bf16.mxu0 0
    %740 = vmatpush1.bf16.xpose.msra.mxu0 0
    %741 = vmatprep.subr.bf16.mxu0 0
    %742 = vmatpush1.bf16.xpose.msra.mxu0 0
    %743 = vmatprep.subr.bf16.mxu0 0
    %744 = vmatpush1.bf16.xpose.msra.mxu0 0
    %745 = vmatprep.mubr.bf16.mxu0 0
    %746 = vmatmul.mubr.bf16.gmra.mrb[0].mxu0 %v708
    %v747 = vpop.f32.mrb[0].mxu0
    %v748 = vadd.f32 0.0, %v747
    %v749 = vpop.f32.mrb[0].mxu0
    %v750 = vpop.f32.mrb[0].mxu0
    %v751 = vpop.f32.mrb[0].mxu0
    %752 = vdwg.mxu0
    %v754 = vsel %vm315, %v602, 0
    %v757 = vsel %vm315, %v610, 0
    %759 = vmatprep.subr.bf16.mxu0 0
    %760 = vmatpush1.bf16.xpose.msra.mxu0 %v757
    %761 = vmatprep.subr.bf16.mxu0 0
    %762 = vmatpush1.bf16.xpose.msra.mxu0 0
    %763 = vmatprep.subr.bf16.mxu0 0
    %764 = vmatpush1.bf16.xpose.msra.mxu0 0
    %765 = vmatprep.subr.bf16.mxu0 0
    %766 = vmatpush1.bf16.xpose.msra.mxu0 0
    %767 = vmatprep.subr.bf16.mxu0 0
    %768 = vmatpush1.bf16.xpose.msra.mxu0 0
    %769 = vmatprep.subr.bf16.mxu0 0
    %770 = vmatpush1.bf16.xpose.msra.mxu0 0
    %771 = vmatprep.subr.bf16.mxu0 0
    %772 = vmatpush1.bf16.xpose.msra.mxu0 0
    %773 = vmatprep.subr.bf16.mxu0 0
    %774 = vmatpush1.bf16.xpose.msra.mxu0 0
    %775 = vmatprep.subr.bf16.mxu0 0
    %776 = vmatpush1.bf16.xpose.msra.mxu0 0
    %777 = vmatprep.subr.bf16.mxu0 0
    %778 = vmatpush1.bf16.xpose.msra.mxu0 0
    %779 = vmatprep.subr.bf16.mxu0 0
    %780 = vmatpush1.bf16.xpose.msra.mxu0 0
    %781 = vmatprep.subr.bf16.mxu0 0
    %782 = vmatpush1.bf16.xpose.msra.mxu0 0
    %783 = vmatprep.subr.bf16.mxu0 0
    %784 = vmatpush1.bf16.xpose.msra.mxu0 0
    %785 = vmatprep.subr.bf16.mxu0 0
    %786 = vmatpush1.bf16.xpose.msra.mxu0 0
    %787 = vmatprep.subr.bf16.mxu0 0
    %788 = vmatpush1.bf16.xpose.msra.mxu0 0
    %789 = vmatprep.subr.bf16.mxu0 0
    %790 = vmatpush1.bf16.xpose.msra.mxu0 0
    %791 = vmatprep.mubr.bf16.mxu0 0
    %792 = vmatmul.mubr.bf16.gmra.mrb[0].mxu0 %v754
    %v793 = vpop.f32.mrb[0].mxu0
    %v794 = vadd.f32 0.0, %v793
    %v795 = vpop.f32.mrb[0].mxu0
    %v796 = vpop.f32.mrb[0].mxu0
    %v797 = vpop.f32.mrb[0].mxu0
    %798 = vdwg.mxu0
    %v800 = vsel %vm315, %v603, 0
    %v803 = vsel %vm315, %v611, 0
    %805 = vmatprep.subr.bf16.mxu0 0
    %806 = vmatpush1.bf16.xpose.msra.mxu0 %v803
    %807 = vmatprep.subr.bf16.mxu0 0
    %808 = vmatpush1.bf16.xpose.msra.mxu0 0
    %809 = vmatprep.subr.bf16.mxu0 0
    %810 = vmatpush1.bf16.xpose.msra.mxu0 0
    %811 = vmatprep.subr.bf16.mxu0 0
    %812 = vmatpush1.bf16.xpose.msra.mxu0 0
    %813 = vmatprep.subr.bf16.mxu0 0
    %814 = vmatpush1.bf16.xpose.msra.mxu0 0
    %815 = vmatprep.subr.bf16.mxu0 0
    %816 = vmatpush1.bf16.xpose.msra.mxu0 0
    %817 = vmatprep.subr.bf16.mxu0 0
    %818 = vmatpush1.bf16.xpose.msra.mxu0 0
    %819 = vmatprep.subr.bf16.mxu0 0
    %820 = vmatpush1.bf16.xpose.msra.mxu0 0
    %821 = vmatprep.subr.bf16.mxu0 0
    %822 = vmatpush1.bf16.xpose.msra.mxu0 0
    %823 = vmatprep.subr.bf16.mxu0 0
    %824 = vmatpush1.bf16.xpose.msra.mxu0 0
    %825 = vmatprep.subr.bf16.mxu0 0
    %826 = vmatpush1.bf16.xpose.msra.mxu0 0
    %827 = vmatprep.subr.bf16.mxu0 0
    %828 = vmatpush1.bf16.xpose.msra.mxu0 0
    %829 = vmatprep.subr.bf16.mxu0 0
    %830 = vmatpush1.bf16.xpose.msra.mxu0 0
    %831 = vmatprep.subr.bf16.mxu0 0
    %832 = vmatpush1.bf16.xpose.msra.mxu0 0
    %833 = vmatprep.subr.bf16.mxu0 0
    %834 = vmatpush1.bf16.xpose.msra.mxu0 0
    %835 = vmatprep.subr.bf16.mxu0 0
    %836 = vmatpush1.bf16.xpose.msra.mxu0 0
    %837 = vmatprep.mubr.bf16.mxu0 0
    %838 = vmatmul.mubr.bf16.gmra.mrb[0].mxu0 %v800
    %v839 = vpop.f32.mrb[0].mxu0
    %v840 = vadd.f32 0.0, %v839
    %v841 = vpop.f32.mrb[0].mxu0
    %v842 = vpop.f32.mrb[0].mxu0
    %v843 = vpop.f32.mrb[0].mxu0
    %844 = vdwg.mxu0
    %v846 = vsel %vm315, %v604, 0
    %v849 = vsel %vm315, %v612, 0
    %851 = vmatprep.subr.bf16.mxu0 0
    %852 = vmatpush1.bf16.xpose.msra.mxu0 %v849
    %853 = vmatprep.subr.bf16.mxu0 0
    %854 = vmatpush1.bf16.xpose.msra.mxu0 0
    %855 = vmatprep.subr.bf16.mxu0 0
    %856 = vmatpush1.bf16.xpose.msra.mxu0 0
    %857 = vmatprep.subr.bf16.mxu0 0
    %858 = vmatpush1.bf16.xpose.msra.mxu0 0
    %859 = vmatprep.subr.bf16.mxu0 0
    %860 = vmatpush1.bf16.xpose.msra.mxu0 0
    %861 = vmatprep.subr.bf16.mxu0 0
    %862 = vmatpush1.bf16.xpose.msra.mxu0 0
    %863 = vmatprep.subr.bf16.mxu0 0
    %864 = vmatpush1.bf16.xpose.msra.mxu0 0
    %865 = vmatprep.subr.bf16.mxu0 0
    %866 = vmatpush1.bf16.xpose.msra.mxu0 0
    %867 = vmatprep.subr.bf16.mxu0 0
    %868 = vmatpush1.bf16.xpose.msra.mxu0 0
    %869 = vmatprep.subr.bf16.mxu0 0
    %870 = vmatpush1.bf16.xpose.msra.mxu0 0
    %871 = vmatprep.subr.bf16.mxu0 0
    %872 = vmatpush1.bf16.xpose.msra.mxu0 0
    %873 = vmatprep.subr.bf16.mxu0 0
    %874 = vmatpush1.bf16.xpose.msra.mxu0 0
    %875 = vmatprep.subr.bf16.mxu0 0
    %876 = vmatpush1.bf16.xpose.msra.mxu0 0
    %877 = vmatprep.subr.bf16.mxu0 0
    %878 = vmatpush1.bf16.xpose.msra.mxu0 0
    %879 = vmatprep.subr.bf16.mxu0 0
    %880 = vmatpush1.bf16.xpose.msra.mxu0 0
    %881 = vmatprep.subr.bf16.mxu0 0
    %882 = vmatpush1.bf16.xpose.msra.mxu0 0
    %883 = vmatprep.mubr.bf16.mxu0 0
    %884 = vmatmul.mubr.bf16.gmra.mrb[0].mxu0 %v846
    %v885 = vpop.f32.mrb[0].mxu0
    %v886 = vadd.f32 0.0, %v885
    %v887 = vpop.f32.mrb[0].mxu0
    %v888 = vpop.f32.mrb[0].mxu0
    %v889 = vpop.f32.mrb[0].mxu0
    %890 = vdwg.mxu0
    %v892 = vsel %vm315, %v605, 0
    %v895 = vsel %vm315, %v613, 0
    %897 = vmatprep.subr.bf16.mxu0 0
    %898 = vmatpush1.bf16.xpose.msra.mxu0 %v895
    %899 = vmatprep.subr.bf16.mxu0 0
    %900 = vmatpush1.bf16.xpose.msra.mxu0 0
    %901 = vmatprep.subr.bf16.mxu0 0
    %902 = vmatpush1.bf16.xpose.msra.mxu0 0
    %903 = vmatprep.subr.bf16.mxu0 0
    %904 = vmatpush1.bf16.xpose.msra.mxu0 0
    %905 = vmatprep.subr.bf16.mxu0 0
    %906 = vmatpush1.bf16.xpose.msra.mxu0 0
    %907 = vmatprep.subr.bf16.mxu0 0
    %908 = vmatpush1.bf16.xpose.msra.mxu0 0
    %909 = vmatprep.subr.bf16.mxu0 0
    %910 = vmatpush1.bf16.xpose.msra.mxu0 0
    %911 = vmatprep.subr.bf16.mxu0 0
    %912 = vmatpush1.bf16.xpose.msra.mxu0 0
    %913 = vmatprep.subr.bf16.mxu0 0
    %914 = vmatpush1.bf16.xpose.msra.mxu0 0
    %915 = vmatprep.subr.bf16.mxu0 0
    %916 = vmatpush1.bf16.xpose.msra.mxu0 0
    %917 = vmatprep.subr.bf16.mxu0 0
    %918 = vmatpush1.bf16.xpose.msra.mxu0 0
    %919 = vmatprep.subr.bf16.mxu0 0
    %920 = vmatpush1.bf16.xpose.msra.mxu0 0
    %921 = vmatprep.subr.bf16.mxu0 0
    %922 = vmatpush1.bf16.xpose.msra.mxu0 0
    %923 = vmatprep.subr.bf16.mxu0 0
    %924 = vmatpush1.bf16.xpose.msra.mxu0 0
    %925 = vmatprep.subr.bf16.mxu0 0
    %926 = vmatpush1.bf16.xpose.msra.mxu0 0
    %927 = vmatprep.subr.bf16.mxu0 0
    %928 = vmatpush1.bf16.xpose.msra.mxu0 0
    %929 = vmatprep.mubr.bf16.mxu0 0
    %930 = vmatmul.mubr.bf16.gmra.mrb[0].mxu0 %v892
    %v931 = vpop.f32.mrb[0].mxu0
    %v932 = vadd.f32 0.0, %v931
    %v933 = vpop.f32.mrb[0].mxu0
    %v934 = vpop.f32.mrb[0].mxu0
    %v935 = vpop.f32.mrb[0].mxu0
    %936 = vdwg.mxu0
    %v938 = vsel %vm315, %v606, 0
    %v941 = vsel %vm315, %v614, 0
    %943 = vmatprep.subr.bf16.mxu0 0
    %944 = vmatpush1.bf16.xpose.msra.mxu0 %v941
    %945 = vmatprep.subr.bf16.mxu0 0
    %946 = vmatpush1.bf16.xpose.msra.mxu0 0
    %947 = vmatprep.subr.bf16.mxu0 0
    %948 = vmatpush1.bf16.xpose.msra.mxu0 0
    %949 = vmatprep.subr.bf16.mxu0 0
    %950 = vmatpush1.bf16.xpose.msra.mxu0 0
    %951 = vmatprep.subr.bf16.mxu0 0
    %952 = vmatpush1.bf16.xpose.msra.mxu0 0
    %953 = vmatprep.subr.bf16.mxu0 0
    %954 = vmatpush1.bf16.xpose.msra.mxu0 0
    %955 = vmatprep.subr.bf16.mxu0 0
    %956 = vmatpush1.bf16.xpose.msra.mxu0 0
    %957 = vmatprep.subr.bf16.mxu0 0
    %958 = vmatpush1.bf16.xpose.msra.mxu0 0
    %959 = vmatprep.subr.bf16.mxu0 0
    %960 = vmatpush1.bf16.xpose.msra.mxu0 0
    %961 = vmatprep.subr.bf16.mxu0 0
    %962 = vmatpush1.bf16.xpose.msra.mxu0 0
    %963 = vmatprep.subr.bf16.mxu0 0
    %964 = vmatpush1.bf16.xpose.msra.mxu0 0
    %965 = vmatprep.subr.bf16.mxu0 0
    %966 = vmatpush1.bf16.xpose.msra.mxu0 0
    %967 = vmatprep.subr.bf16.mxu0 0
    %968 = vmatpush1.bf16.xpose.msra.mxu0 0
    %969 = vmatprep.subr.bf16.mxu0 0
    %970 = vmatpush1.bf16.xpose.msra.mxu0 0
    %971 = vmatprep.subr.bf16.mxu0 0
    %972 = vmatpush1.bf16.xpose.msra.mxu0 0
    %973 = vmatprep.subr.bf16.mxu0 0
    %974 = vmatpush1.bf16.xpose.msra.mxu0 0
    %975 = vmatprep.mubr.bf16.mxu0 0
    %976 = vmatmul.mubr.bf16.gmra.mrb[0].mxu0 %v938
    %v977 = vpop.f32.mrb[0].mxu0
    %v978 = vadd.f32 0.0, %v977
    %v979 = vpop.f32.mrb[0].mxu0
    %v980 = vpop.f32.mrb[0].mxu0
    %v981 = vpop.f32.mrb[0].mxu0
    %982 = vdwg.mxu0
    %v983 = vld [vmem:[#allocation8] sm:$0xff]
    %v984 = vld [vmem:[#allocation8 + $0x8] sm:$0xff]
    %v985 = vadd.f32 %v656, %v983
    %v986 = vadd.f32 %v702, %v983
    %v987 = vadd.f32 %v748, %v983
    %v988 = vadd.f32 %v794, %v983
    %v989 = vadd.f32 %v840, %v984
    %v990 = vadd.f32 %v886, %v984
    %v991 = vadd.f32 %v932, %v984
    %v992 = vadd.f32 %v978, %v984
    %v993 = vsel %vm315, %v985, -inf
    %994 = vmax.xlane.f32.xlu0 %v993
    %v995 = vpop.xlane.xlu0 %994
    %v996 = vsel %vm315, %v986, -inf
    %997 = vmax.xlane.f32.xlu0 %v996
    %v998 = vpop.xlane.xlu0 %997
    %v999 = vsel %vm315, %v987, -inf
    %1000 = vmax.xlane.f32.xlu0 %v999
    %v1001 = vpop.xlane.xlu0 %1000
    %v1002 = vsel %vm315, %v988, -inf
    %1003 = vmax.xlane.f32.xlu0 %v1002
    %v1004 = vpop.xlane.xlu0 %1003
    %v1005 = vsel %vm315, %v989, -inf
    %1006 = vmax.xlane.f32.xlu0 %v1005
    %v1007 = vpop.xlane.xlu0 %1006
    %v1008 = vsel %vm315, %v990, -inf
    %1009 = vmax.xlane.f32.xlu0 %v1008
    %v1010 = vpop.xlane.xlu0 %1009
    %v1011 = vsel %vm315, %v991, -inf
    %1012 = vmax.xlane.f32.xlu0 %v1011
    %v1013 = vpop.xlane.xlu0 %1012
    %v1014 = vsel %vm315, %v992, -inf
    %1015 = vmax.xlane.f32.xlu0 %v1014
    %v1016 = vpop.xlane.xlu0 %1015
    %v1017 = vsub.f32 %v985, %v995
    %v1018 = vsub.f32 %v986, %v998
    %v1019 = vsub.f32 %v987, %v1001
    %v1020 = vsub.f32 %v988, %v1004
    %v1021 = vsub.f32 %v989, %v1007
    %v1022 = vsub.f32 %v990, %v1010
    %v1023 = vsub.f32 %v991, %v1013
    %v1024 = vsub.f32 %v992, %v1016
    %v1025 = vmul.f32 %v1017, 1.442695
    %v1026 = vpow.pop %v1025
    %v1027 = vmul.f32 %v1018, 1.442695
    %v1028 = vpow.pop %v1027
    %v1029 = vmul.f32 %v1019, 1.442695
    %v1030 = vpow.pop %v1029
    %v1031 = vmul.f32 %v1020, 1.442695
    %v1032 = vpow.pop %v1031
    %v1033 = vmul.f32 %v1021, 1.442695
    %v1034 = vpow.pop %v1033
    %v1035 = vmul.f32 %v1022, 1.442695
    %v1036 = vpow.pop %v1035
    %v1037 = vmul.f32 %v1023, 1.442695
    %v1038 = vpow.pop %v1037
    %v1039 = vmul.f32 %v1024, 1.442695
    %v1040 = vpow.pop %v1039
    %v1041 = vsel %vm315, %v1026, 0.0
    %1042 = vadd.xlane.f32.xlu0 %v1041
    %v1043 = vpop.xlane.xlu0 %1042
    %v1044 = vsel %vm315, %v1028, 0.0
    %1045 = vadd.xlane.f32.xlu0 %v1044
    %v1046 = vpop.xlane.xlu0 %1045
    %v1047 = vsel %vm315, %v1030, 0.0
    %1048 = vadd.xlane.f32.xlu0 %v1047
    %v1049 = vpop.xlane.xlu0 %1048
    %v1050 = vsel %vm315, %v1032, 0.0
    %1051 = vadd.xlane.f32.xlu0 %v1050
    %v1052 = vpop.xlane.xlu0 %1051
    %v1053 = vsel %vm315, %v1034, 0.0
    %1054 = vadd.xlane.f32.xlu0 %v1053
    %v1055 = vpop.xlane.xlu0 %1054
    %v1056 = vsel %vm315, %v1036, 0.0
    %1057 = vadd.xlane.f32.xlu0 %v1056
    %v1058 = vpop.xlane.xlu0 %1057
    %v1059 = vsel %vm315, %v1038, 0.0
    %1060 = vadd.xlane.f32.xlu0 %v1059
    %v1061 = vpop.xlane.xlu0 %1060
    %v1062 = vsel %vm315, %v1040, 0.0
    %1063 = vadd.xlane.f32.xlu0 %v1062
    %v1064 = vpop.xlane.xlu0 %1063
    %v1065 = vrcp.pop %v1043
    %v1066 = vrcp.pop %v1046
    %v1067 = vrcp.pop %v1049
    %v1068 = vrcp.pop %v1052
    %v1069 = vrcp.pop %v1055
    %v1070 = vrcp.pop %v1058
    %v1071 = vrcp.pop %v1061
    %v1072 = vrcp.pop %v1064
    %v1073 = vmul.f32 %v1026, %v1065
    %v1074 = vmul.f32 %v1028, %v1066
    %v1075 = vmul.f32 %v1030, %v1067
    %v1076 = vmul.f32 %v1032, %v1068
    %v1077 = vmul.f32 %v1034, %v1069
    %v1078 = vmul.f32 %v1036, %v1070
    %v1079 = vmul.f32 %v1038, %v1071
    %v1080 = vmul.f32 %v1040, %v1072
    %v1081 = vpack.c.bf16 %v1073, %v1073
    %v1082 = vpack.c.bf16 %v1074, %v1074
    %v1083 = vpack.c.bf16 %v1075, %v1075
    %v1084 = vpack.c.bf16 %v1076, %v1076
    %v1085 = vpack.c.bf16 %v1077, %v1077
    %v1086 = vpack.c.bf16 %v1078, %v1078
    %v1087 = vpack.c.bf16 %v1079, %v1079
    %v1088 = vpack.c.bf16 %v1080, %v1080
    %v1089 = vpack.c.bf16 %v569, %v569
    %v1090 = vpack.c.bf16 %v572, %v572
    %v1091 = vpack.c.bf16 %v577, %v577
    %v1092 = vpack.c.bf16 %v580, %v580
    %v1093 = vpack.c.bf16 %v585, %v585
    %v1094 = vpack.c.bf16 %v588, %v588
    %v1095 = vpack.c.bf16 %v593, %v593
    %v1096 = vpack.c.bf16 %v596, %v596
    %v1098 = vsel %vm315, %v1081, 0
    %v1101 = vsel %vm328, %v1089, 0
    %1103 = vmatprep.subr.bf16.mxu0 0
    %1104 = vmatpush1.bf16.msra.mxu0 %v1101
    %1105 = vmatprep.subr.bf16.mxu0 0
    %1106 = vmatpush1.bf16.msra.mxu0 0
    %1107 = vmatprep.subr.bf16.mxu0 0
    %1108 = vmatpush1.bf16.msra.mxu0 0
    %1109 = vmatprep.subr.bf16.mxu0 0
    %1110 = vmatpush1.bf16.msra.mxu0 0
    %1111 = vmatprep.subr.bf16.mxu0 0
    %1112 = vmatpush1.bf16.msra.mxu0 0
    %1113 = vmatprep.subr.bf16.mxu0 0
    %1114 = vmatpush1.bf16.msra.mxu0 0
    %1115 = vmatprep.subr.bf16.mxu0 0
    %1116 = vmatpush1.bf16.msra.mxu0 0
    %1117 = vmatprep.subr.bf16.mxu0 0
    %1118 = vmatpush1.bf16.msra.mxu0 0
    %1119 = vmatprep.subr.bf16.mxu0 0
    %1120 = vmatpush1.bf16.msra.mxu0 0
    %1121 = vmatprep.subr.bf16.mxu0 0
    %1122 = vmatpush1.bf16.msra.mxu0 0
    %1123 = vmatprep.subr.bf16.mxu0 0
    %1124 = vmatpush1.bf16.msra.mxu0 0
    %1125 = vmatprep.subr.bf16.mxu0 0
    %1126 = vmatpush1.bf16.msra.mxu0 0
    %1127 = vmatprep.subr.bf16.mxu0 0
    %1128 = vmatpush1.bf16.msra.mxu0 0
    %1129 = vmatprep.subr.bf16.mxu0 0
    %1130 = vmatpush1.bf16.msra.mxu0 0
    %1131 = vmatprep.subr.bf16.mxu0 0
    %1132 = vmatpush1.bf16.msra.mxu0 0
    %1133 = vmatprep.subr.bf16.mxu0 0
    %1134 = vmatpush1.bf16.msra.mxu0 0
    %1135 = vmatprep.mubr.bf16.mxu0 0
    %1136 = vmatmul.mubr.bf16.gmra.mrb[0].mxu0 %v1098
    %v1137 = vpop.f32.mrb[0].mxu0
    %v1138 = vadd.f32 0.0, %v1137
    %v1139 = vpop.f32.mrb[0].mxu0
    %v1140 = vpop.f32.mrb[0].mxu0
    %v1141 = vpop.f32.mrb[0].mxu0
    %1142 = vdwg.mxu0
    %v1144 = vsel %vm315, %v1082, 0
    %v1147 = vsel %vm328, %v1090, 0
    %1149 = vmatprep.subr.bf16.mxu0 0
    %1150 = vmatpush1.bf16.msra.mxu0 %v1147
    %1151 = vmatprep.subr.bf16.mxu0 0
    %1152 = vmatpush1.bf16.msra.mxu0 0
    %1153 = vmatprep.subr.bf16.mxu0 0
    %1154 = vmatpush1.bf16.msra.mxu0 0
    %1155 = vmatprep.subr.bf16.mxu0 0
    %1156 = vmatpush1.bf16.msra.mxu0 0
    %1157 = vmatprep.subr.bf16.mxu0 0
    %1158 = vmatpush1.bf16.msra.mxu0 0
    %1159 = vmatprep.subr.bf16.mxu0 0
    %1160 = vmatpush1.bf16.msra.mxu0 0
    %1161 = vmatprep.subr.bf16.mxu0 0
    %1162 = vmatpush1.bf16.msra.mxu0 0
    %1163 = vmatprep.subr.bf16.mxu0 0
    %1164 = vmatpush1.bf16.msra.mxu0 0
    %1165 = vmatprep.subr.bf16.mxu0 0
    %1166 = vmatpush1.bf16.msra.mxu0 0
    %1167 = vmatprep.subr.bf16.mxu0 0
    %1168 = vmatpush1.bf16.msra.mxu0 0
    %1169 = vmatprep.subr.bf16.mxu0 0
    %1170 = vmatpush1.bf16.msra.mxu0 0
    %1171 = vmatprep.subr.bf16.mxu0 0
    %1172 = vmatpush1.bf16.msra.mxu0 0
    %1173 = vmatprep.subr.bf16.mxu0 0
    %1174 = vmatpush1.bf16.msra.mxu0 0
    %1175 = vmatprep.subr.bf16.mxu0 0
    %1176 = vmatpush1.bf16.msra.mxu0 0
    %1177 = vmatprep.subr.bf16.mxu0 0
    %1178 = vmatpush1.bf16.msra.mxu0 0
    %1179 = vmatprep.subr.bf16.mxu0 0
    %1180 = vmatpush1.bf16.msra.mxu0 0
    %1181 = vmatprep.mubr.bf16.mxu0 0
    %1182 = vmatmul.mubr.bf16.gmra.mrb[0].mxu0 %v1144
    %v1183 = vpop.f32.mrb[0].mxu0
    %v1184 = vadd.f32 0.0, %v1183
    %v1185 = vpop.f32.mrb[0].mxu0
    %v1186 = vpop.f32.mrb[0].mxu0
    %v1187 = vpop.f32.mrb[0].mxu0
    %1188 = vdwg.mxu0
    %v1190 = vsel %vm315, %v1083, 0
    %v1193 = vsel %vm328, %v1091, 0
    %1195 = vmatprep.subr.bf16.mxu0 0
    %1196 = vmatpush1.bf16.msra.mxu0 %v1193
    %1197 = vmatprep.subr.bf16.mxu0 0
    %1198 = vmatpush1.bf16.msra.mxu0 0
    %1199 = vmatprep.subr.bf16.mxu0 0
    %1200 = vmatpush1.bf16.msra.mxu0 0
    %1201 = vmatprep.subr.bf16.mxu0 0
    %1202 = vmatpush1.bf16.msra.mxu0 0
    %1203 = vmatprep.subr.bf16.mxu0 0
    %1204 = vmatpush1.bf16.msra.mxu0 0
    %1205 = vmatprep.subr.bf16.mxu0 0
    %1206 = vmatpush1.bf16.msra.mxu0 0
    %1207 = vmatprep.subr.bf16.mxu0 0
    %1208 = vmatpush1.bf16.msra.mxu0 0
    %1209 = vmatprep.subr.bf16.mxu0 0
    %1210 = vmatpush1.bf16.msra.mxu0 0
    %1211 = vmatprep.subr.bf16.mxu0 0
    %1212 = vmatpush1.bf16.msra.mxu0 0
    %1213 = vmatprep.subr.bf16.mxu0 0
    %1214 = vmatpush1.bf16.msra.mxu0 0
    %1215 = vmatprep.subr.bf16.mxu0 0
    %1216 = vmatpush1.bf16.msra.mxu0 0
    %1217 = vmatprep.subr.bf16.mxu0 0
    %1218 = vmatpush1.bf16.msra.mxu0 0
    %1219 = vmatprep.subr.bf16.mxu0 0
    %1220 = vmatpush1.bf16.msra.mxu0 0
    %1221 = vmatprep.subr.bf16.mxu0 0
    %1222 = vmatpush1.bf16.msra.mxu0 0
    %1223 = vmatprep.subr.bf16.mxu0 0
    %1224 = vmatpush1.bf16.msra.mxu0 0
    %1225 = vmatprep.subr.bf16.mxu0 0
    %1226 = vmatpush1.bf16.msra.mxu0 0
    %1227 = vmatprep.mubr.bf16.mxu0 0
    %1228 = vmatmul.mubr.bf16.gmra.mrb[0].mxu0 %v1190
    %v1229 = vpop.f32.mrb[0].mxu0
    %v1230 = vadd.f32 0.0, %v1229
    %v1231 = vpop.f32.mrb[0].mxu0
    %v1232 = vpop.f32.mrb[0].mxu0
    %v1233 = vpop.f32.mrb[0].mxu0
    %1234 = vdwg.mxu0
    %v1236 = vsel %vm315, %v1084, 0
    %v1239 = vsel %vm328, %v1092, 0
    %1241 = vmatprep.subr.bf16.mxu0 0
    %1242 = vmatpush1.bf16.msra.mxu0 %v1239
    %1243 = vmatprep.subr.bf16.mxu0 0
    %1244 = vmatpush1.bf16.msra.mxu0 0
    %1245 = vmatprep.subr.bf16.mxu0 0
    %1246 = vmatpush1.bf16.msra.mxu0 0
    %1247 = vmatprep.subr.bf16.mxu0 0
    %1248 = vmatpush1.bf16.msra.mxu0 0
    %1249 = vmatprep.subr.bf16.mxu0 0
    %1250 = vmatpush1.bf16.msra.mxu0 0
    %1251 = vmatprep.subr.bf16.mxu0 0
    %1252 = vmatpush1.bf16.msra.mxu0 0
    %1253 = vmatprep.subr.bf16.mxu0 0
    %1254 = vmatpush1.bf16.msra.mxu0 0
    %1255 = vmatprep.subr.bf16.mxu0 0
    %1256 = vmatpush1.bf16.msra.mxu0 0
    %1257 = vmatprep.subr.bf16.mxu0 0
    %1258 = vmatpush1.bf16.msra.mxu0 0
    %1259 = vmatprep.subr.bf16.mxu0 0
    %1260 = vmatpush1.bf16.msra.mxu0 0
    %1261 = vmatprep.subr.bf16.mxu0 0
    %1262 = vmatpush1.bf16.msra.mxu0 0
    %1263 = vmatprep.subr.bf16.mxu0 0
    %1264 = vmatpush1.bf16.msra.mxu0 0
    %1265 = vmatprep.subr.bf16.mxu0 0
    %1266 = vmatpush1.bf16.msra.mxu0 0
    %1267 = vmatprep.subr.bf16.mxu0 0
    %1268 = vmatpush1.bf16.msra.mxu0 0
    %1269 = vmatprep.subr.bf16.mxu0 0
    %1270 = vmatpush1.bf16.msra.mxu0 0
    %1271 = vmatprep.subr.bf16.mxu0 0
    %1272 = vmatpush1.bf16.msra.mxu0 0
    %1273 = vmatprep.mubr.bf16.mxu0 0
    %1274 = vmatmul.mubr.bf16.gmra.mrb[0].mxu0 %v1236
    %v1275 = vpop.f32.mrb[0].mxu0
    %v1276 = vadd.f32 0.0, %v1275
    %v1277 = vpop.f32.mrb[0].mxu0
    %v1278 = vpop.f32.mrb[0].mxu0
    %v1279 = vpop.f32.mrb[0].mxu0
    %1280 = vdwg.mxu0
    %v1282 = vsel %vm315, %v1085, 0
    %v1285 = vsel %vm328, %v1093, 0
    %1287 = vmatprep.subr.bf16.mxu0 0
    %1288 = vmatpush1.bf16.msra.mxu0 %v1285
    %1289 = vmatprep.subr.bf16.mxu0 0
    %1290 = vmatpush1.bf16.msra.mxu0 0
    %1291 = vmatprep.subr.bf16.mxu0 0
    %1292 = vmatpush1.bf16.msra.mxu0 0
    %1293 = vmatprep.subr.bf16.mxu0 0
    %1294 = vmatpush1.bf16.msra.mxu0 0
    %1295 = vmatprep.subr.bf16.mxu0 0
    %1296 = vmatpush1.bf16.msra.mxu0 0
    %1297 = vmatprep.subr.bf16.mxu0 0
    %1298 = vmatpush1.bf16.msra.mxu0 0
    %1299 = vmatprep.subr.bf16.mxu0 0
    %1300 = vmatpush1.bf16.msra.mxu0 0
    %1301 = vmatprep.subr.bf16.mxu0 0
    %1302 = vmatpush1.bf16.msra.mxu0 0
    %1303 = vmatprep.subr.bf16.mxu0 0
    %1304 = vmatpush1.bf16.msra.mxu0 0
    %1305 = vmatprep.subr.bf16.mxu0 0
    %1306 = vmatpush1.bf16.msra.mxu0 0
    %1307 = vmatprep.subr.bf16.mxu0 0
    %1308 = vmatpush1.bf16.msra.mxu0 0
    %1309 = vmatprep.subr.bf16.mxu0 0
    %1310 = vmatpush1.bf16.msra.mxu0 0
    %1311 = vmatprep.subr.bf16.mxu0 0
    %1312 = vmatpush1.bf16.msra.mxu0 0
    %1313 = vmatprep.subr.bf16.mxu0 0
    %1314 = vmatpush1.bf16.msra.mxu0 0
    %1315 = vmatprep.subr.bf16.mxu0 0
    %1316 = vmatpush1.bf16.msra.mxu0 0
    %1317 = vmatprep.subr.bf16.mxu0 0
    %1318 = vmatpush1.bf16.msra.mxu0 0
    %1319 = vmatprep.mubr.bf16.mxu0 0
    %1320 = vmatmul.mubr.bf16.gmra.mrb[0].mxu0 %v1282
    %v1321 = vpop.f32.mrb[0].mxu0
    %v1322 = vadd.f32 0.0, %v1321
    %v1323 = vpop.f32.mrb[0].mxu0
    %v1324 = vpop.f32.mrb[0].mxu0
    %v1325 = vpop.f32.mrb[0].mxu0
    %1326 = vdwg.mxu0
    %v1328 = vsel %vm315, %v1086, 0
    %v1331 = vsel %vm328, %v1094, 0
    %1333 = vmatprep.subr.bf16.mxu0 0
    %1334 = vmatpush1.bf16.msra.mxu0 %v1331
    %1335 = vmatprep.subr.bf16.mxu0 0
    %1336 = vmatpush1.bf16.msra.mxu0 0
    %1337 = vmatprep.subr.bf16.mxu0 0
    %1338 = vmatpush1.bf16.msra.mxu0 0
    %1339 = vmatprep.subr.bf16.mxu0 0
    %1340 = vmatpush1.bf16.msra.mxu0 0
    %1341 = vmatprep.subr.bf16.mxu0 0
    %1342 = vmatpush1.bf16.msra.mxu0 0
    %1343 = vmatprep.subr.bf16.mxu0 0
    %1344 = vmatpush1.bf16.msra.mxu0 0
    %1345 = vmatprep.subr.bf16.mxu0 0
    %1346 = vmatpush1.bf16.msra.mxu0 0
    %1347 = vmatprep.subr.bf16.mxu0 0
    %1348 = vmatpush1.bf16.msra.mxu0 0
    %1349 = vmatprep.subr.bf16.mxu0 0
    %1350 = vmatpush1.bf16.msra.mxu0 0
    %1351 = vmatprep.subr.bf16.mxu0 0
    %1352 = vmatpush1.bf16.msra.mxu0 0
    %1353 = vmatprep.subr.bf16.mxu0 0
    %1354 = vmatpush1.bf16.msra.mxu0 0
    %1355 = vmatprep.subr.bf16.mxu0 0
    %1356 = vmatpush1.bf16.msra.mxu0 0
    %1357 = vmatprep.subr.bf16.mxu0 0
    %1358 = vmatpush1.bf16.msra.mxu0 0
    %1359 = vmatprep.subr.bf16.mxu0 0
    %1360 = vmatpush1.bf16.msra.mxu0 0
    %1361 = vmatprep.subr.bf16.mxu0 0
    %1362 = vmatpush1.bf16.msra.mxu0 0
    %1363 = vmatprep.subr.bf16.mxu0 0
    %1364 = vmatpush1.bf16.msra.mxu0 0
    %1365 = vmatprep.mubr.bf16.mxu0 0
    %1366 = vmatmul.mubr.bf16.gmra.mrb[0].mxu0 %v1328
    %v1367 = vpop.f32.mrb[0].mxu0
    %v1368 = vadd.f32 0.0, %v1367
    %v1369 = vpop.f32.mrb[0].mxu0
    %v1370 = vpop.f32.mrb[0].mxu0
    %v1371 = vpop.f32.mrb[0].mxu0
    %1372 = vdwg.mxu0
    %v1374 = vsel %vm315, %v1087, 0
    %v1377 = vsel %vm328, %v1095, 0
    %1379 = vmatprep.subr.bf16.mxu0 0
    %1380 = vmatpush1.bf16.msra.mxu0 %v1377
    %1381 = vmatprep.subr.bf16.mxu0 0
    %1382 = vmatpush1.bf16.msra.mxu0 0
    %1383 = vmatprep.subr.bf16.mxu0 0
    %1384 = vmatpush1.bf16.msra.mxu0 0
    %1385 = vmatprep.subr.bf16.mxu0 0
    %1386 = vmatpush1.bf16.msra.mxu0 0
    %1387 = vmatprep.subr.bf16.mxu0 0
    %1388 = vmatpush1.bf16.msra.mxu0 0
    %1389 = vmatprep.subr.bf16.mxu0 0
    %1390 = vmatpush1.bf16.msra.mxu0 0
    %1391 = vmatprep.subr.bf16.mxu0 0
    %1392 = vmatpush1.bf16.msra.mxu0 0
    %1393 = vmatprep.subr.bf16.mxu0 0
    %1394 = vmatpush1.bf16.msra.mxu0 0
    %1395 = vmatprep.subr.bf16.mxu0 0
    %1396 = vmatpush1.bf16.msra.mxu0 0
    %1397 = vmatprep.subr.bf16.mxu0 0
    %1398 = vmatpush1.bf16.msra.mxu0 0
    %1399 = vmatprep.subr.bf16.mxu0 0
    %1400 = vmatpush1.bf16.msra.mxu0 0
    %1401 = vmatprep.subr.bf16.mxu0 0
    %1402 = vmatpush1.bf16.msra.mxu0 0
    %1403 = vmatprep.subr.bf16.mxu0 0
    %1404 = vmatpush1.bf16.msra.mxu0 0
    %1405 = vmatprep.subr.bf16.mxu0 0
    %1406 = vmatpush1.bf16.msra.mxu0 0
    %1407 = vmatprep.subr.bf16.mxu0 0
    %1408 = vmatpush1.bf16.msra.mxu0 0
    %1409 = vmatprep.subr.bf16.mxu0 0
    %1410 = vmatpush1.bf16.msra.mxu0 0
    %1411 = vmatprep.mubr.bf16.mxu0 0
    %1412 = vmatmul.mubr.bf16.gmra.mrb[0].mxu0 %v1374
    %v1413 = vpop.f32.mrb[0].mxu0
    %v1414 = vadd.f32 0.0, %v1413
    %v1415 = vpop.f32.mrb[0].mxu0
    %v1416 = vpop.f32.mrb[0].mxu0
    %v1417 = vpop.f32.mrb[0].mxu0
    %1418 = vdwg.mxu0
    %v1420 = vsel %vm315, %v1088, 0
    %v1423 = vsel %vm328, %v1096, 0
    %1425 = vmatprep.subr.bf16.mxu0 0
    %1426 = vmatpush1.bf16.msra.mxu0 %v1423
    %1427 = vmatprep.subr.bf16.mxu0 0
    %1428 = vmatpush1.bf16.msra.mxu0 0
    %1429 = vmatprep.subr.bf16.mxu0 0
    %1430 = vmatpush1.bf16.msra.mxu0 0
    %1431 = vmatprep.subr.bf16.mxu0 0
    %1432 = vmatpush1.bf16.msra.mxu0 0
    %1433 = vmatprep.subr.bf16.mxu0 0
    %1434 = vmatpush1.bf16.msra.mxu0 0
    %1435 = vmatprep.subr.bf16.mxu0 0
    %1436 = vmatpush1.bf16.msra.mxu0 0
    %1437 = vmatprep.subr.bf16.mxu0 0
    %1438 = vmatpush1.bf16.msra.mxu0 0
    %1439 = vmatprep.subr.bf16.mxu0 0
    %1440 = vmatpush1.bf16.msra.mxu0 0
    %1441 = vmatprep.subr.bf16.mxu0 0
    %1442 = vmatpush1.bf16.msra.mxu0 0
    %1443 = vmatprep.subr.bf16.mxu0 0
    %1444 = vmatpush1.bf16.msra.mxu0 0
    %1445 = vmatprep.subr.bf16.mxu0 0
    %1446 = vmatpush1.bf16.msra.mxu0 0
    %1447 = vmatprep.subr.bf16.mxu0 0
    %1448 = vmatpush1.bf16.msra.mxu0 0
    %1449 = vmatprep.subr.bf16.mxu0 0
    %1450 = vmatpush1.bf16.msra.mxu0 0
    %1451 = vmatprep.subr.bf16.mxu0 0
    %1452 = vmatpush1.bf16.msra.mxu0 0
    %1453 = vmatprep.subr.bf16.mxu0 0
    %1454 = vmatpush1.bf16.msra.mxu0 0
    %1455 = vmatprep.subr.bf16.mxu0 0
    %1456 = vmatpush1.bf16.msra.mxu0 0
    %1457 = vmatprep.mubr.bf16.mxu0 0
    %1458 = vmatmul.mubr.bf16.gmra.mrb[0].mxu0 %v1420
    %v1459 = vpop.f32.mrb[0].mxu0
    %v1460 = vadd.f32 0.0, %v1459
    %v1461 = vpop.f32.mrb[0].mxu0
    %v1462 = vpop.f32.mrb[0].mxu0
    %v1463 = vpop.f32.mrb[0].mxu0
    %1464 = vdwg.mxu0
    %v1465 = vpack.c.bf16 %v1322, %v1138
    %v1466 = vld [vmem:[#allocation16] sm:$0xf]
    %v1467 = vpack.c.bf16 %v1368, %v1184
    %s1468 = scalar_lea.vmem [#allocation16], 4
    %v1469 = vld [vmem:[%s1468] sm:$0xf]
    %v1471 = vsel %vm315, %v1467, 0
    %v1474 = vsel %vm328, %v1469, 0
    %1476 = vmatprep.subr.bf16.mxu0 0
    %1477 = vmatpush1.bf16.msra.mxu0 %v1474
    %1478 = vmatprep.subr.bf16.mxu0 0
    %1479 = vmatpush1.bf16.msra.mxu0 0
    %1480 = vmatprep.subr.bf16.mxu0 0
    %1481 = vmatpush1.bf16.msra.mxu0 0
    %1482 = vmatprep.subr.bf16.mxu0 0
    %1483 = vmatpush1.bf16.msra.mxu0 0
    %1484 = vmatprep.subr.bf16.mxu0 0
    %1485 = vmatpush1.bf16.msra.mxu0 0
    %1486 = vmatprep.subr.bf16.mxu0 0
    %1487 = vmatpush1.bf16.msra.mxu0 0
    %1488 = vmatprep.subr.bf16.mxu0 0
    %1489 = vmatpush1.bf16.msra.mxu0 0
    %1490 = vmatprep.subr.bf16.mxu0 0
    %1491 = vmatpush1.bf16.msra.mxu0 0
    %1492 = vmatprep.subr.bf16.mxu0 0
    %1493 = vmatpush1.bf16.msra.mxu0 0
    %1494 = vmatprep.subr.bf16.mxu0 0
    %1495 = vmatpush1.bf16.msra.mxu0 0
    %1496 = vmatprep.subr.bf16.mxu0 0
    %1497 = vmatpush1.bf16.msra.mxu0 0
    %1498 = vmatprep.subr.bf16.mxu0 0
    %1499 = vmatpush1.bf16.msra.mxu0 0
    %1500 = vmatprep.subr.bf16.mxu0 0
    %1501 = vmatpush1.bf16.msra.mxu0 0
    %1502 = vmatprep.subr.bf16.mxu0 0
    %1503 = vmatpush1.bf16.msra.mxu0 0
    %1504 = vmatprep.subr.bf16.mxu0 0
    %1505 = vmatpush1.bf16.msra.mxu0 0
    %1506 = vmatprep.subr.bf16.mxu0 0
    %1507 = vmatpush1.bf16.msra.mxu0 0
    %1508 = vmatprep.mubr.bf16.mxu0 0
    %1509 = vmatmul.mubr.bf16.gmra.mrb[0].mxu0 %v1471
    %v1510 = vpop.f32.mrb[0].mxu0
    %v1511 = vadd.f32 0.0, %v1510
    %v1512 = vpop.f32.mrb[0].mxu0
    %v1513 = vpop.f32.mrb[0].mxu0
    %v1514 = vadd.f32 0.0, %v1513
    %v1515 = vpop.f32.mrb[0].mxu0
    %1516 = vdwg.mxu0
    %v1518 = vsel %vm315, %v1465, 0
    %v1521 = vsel %vm328, %v1466, 0
    %1523 = vmatprep.subr.bf16.mxu0 0
    %1524 = vmatpush1.bf16.msra.mxu0 %v1521
    %1525 = vmatprep.subr.bf16.mxu0 0
    %1526 = vmatpush1.bf16.msra.mxu0 0
    %1527 = vmatprep.subr.bf16.mxu0 0
    %1528 = vmatpush1.bf16.msra.mxu0 0
    %1529 = vmatprep.subr.bf16.mxu0 0
    %1530 = vmatpush1.bf16.msra.mxu0 0
    %1531 = vmatprep.subr.bf16.mxu0 0
    %1532 = vmatpush1.bf16.msra.mxu0 0
    %1533 = vmatprep.subr.bf16.mxu0 0
    %1534 = vmatpush1.bf16.msra.mxu0 0
    %1535 = vmatprep.subr.bf16.mxu0 0
    %1536 = vmatpush1.bf16.msra.mxu0 0
    %1537 = vmatprep.subr.bf16.mxu0 0
    %1538 = vmatpush1.bf16.msra.mxu0 0
    %1539 = vmatprep.subr.bf16.mxu0 0
    %1540 = vmatpush1.bf16.msra.mxu0 0
    %1541 = vmatprep.subr.bf16.mxu0 0
    %1542 = vmatpush1.bf16.msra.mxu0 0
    %1543 = vmatprep.subr.bf16.mxu0 0
    %1544 = vmatpush1.bf16.msra.mxu0 0
    %1545 = vmatprep.subr.bf16.mxu0 0
    %1546 = vmatpush1.bf16.msra.mxu0 0
    %1547 = vmatprep.subr.bf16.mxu0 0
    %1548 = vmatpush1.bf16.msra.mxu0 0
    %1549 = vmatprep.subr.bf16.mxu0 0
    %1550 = vmatpush1.bf16.msra.mxu0 0
    %1551 = vmatprep.subr.bf16.mxu0 0
    %1552 = vmatpush1.bf16.msra.mxu0 0
    %1553 = vmatprep.subr.bf16.mxu0 0
    %1554 = vmatpush1.bf16.msra.mxu0 0
    %1555 = vmatprep.mubr.bf16.mxu0 0
    %1556 = vmatmul.mubr.bf16.gmra.mrb[0].mxu0 %v1518
    %v1557 = vpop.f32.mrb[0].mxu0
    %v1558 = vadd.f32 %v1511, %v1557
    %v1559 = vpop.f32.mrb[0].mxu0
    %v1560 = vpop.f32.mrb[0].mxu0
    %v1561 = vadd.f32 %v1514, %v1560
    %v1562 = vpop.f32.mrb[0].mxu0
    %1563 = vdwg.mxu0
    %v1564 = vpack.c.bf16 %v1414, %v1230
    %s1565 = scalar_lea.vmem [#allocation16], 8
    %v1566 = vld [vmem:[%s1565] sm:$0xf]
    %v1568 = vsel %vm315, %v1564, 0
    %v1571 = vsel %vm328, %v1566, 0
    %1573 = vmatprep.subr.bf16.mxu0 0
    %1574 = vmatpush1.bf16.msra.mxu0 %v1571
    %1575 = vmatprep.subr.bf16.mxu0 0
    %1576 = vmatpush1.bf16.msra.mxu0 0
    %1577 = vmatprep.subr.bf16.mxu0 0
    %1578 = vmatpush1.bf16.msra.mxu0 0
    %1579 = vmatprep.subr.bf16.mxu0 0
    %1580 = vmatpush1.bf16.msra.mxu0 0
    %1581 = vmatprep.subr.bf16.mxu0 0
    %1582 = vmatpush1.bf16.msra.mxu0 0
    %1583 = vmatprep.subr.bf16.mxu0 0
    %1584 = vmatpush1.bf16.msra.mxu0 0
    %1585 = vmatprep.subr.bf16.mxu0 0
    %1586 = vmatpush1.bf16.msra.mxu0 0
    %1587 = vmatprep.subr.bf16.mxu0 0
    %1588 = vmatpush1.bf16.msra.mxu0 0
    %1589 = vmatprep.subr.bf16.mxu0 0
    %1590 = vmatpush1.bf16.msra.mxu0 0
    %1591 = vmatprep.subr.bf16.mxu0 0
    %1592 = vmatpush1.bf16.msra.mxu0 0
    %1593 = vmatprep.subr.bf16.mxu0 0
    %1594 = vmatpush1.bf16.msra.mxu0 0
    %1595 = vmatprep.subr.bf16.mxu0 0
    %1596 = vmatpush1.bf16.msra.mxu0 0
    %1597 = vmatprep.subr.bf16.mxu0 0
    %1598 = vmatpush1.bf16.msra.mxu0 0
    %1599 = vmatprep.subr.bf16.mxu0 0
    %1600 = vmatpush1.bf16.msra.mxu0 0
    %1601 = vmatprep.subr.bf16.mxu0 0
    %1602 = vmatpush1.bf16.msra.mxu0 0
    %1603 = vmatprep.subr.bf16.mxu0 0
    %1604 = vmatpush1.bf16.msra.mxu0 0
    %1605 = vmatprep.mubr.bf16.mxu0 0
    %1606 = vmatmul.mubr.bf16.gmra.mrb[0].mxu0 %v1568
    %v1607 = vpop.f32.mrb[0].mxu0
    %v1608 = vadd.f32 0.0, %v1607
    %v1609 = vpop.f32.mrb[0].mxu0
    %v1610 = vpop.f32.mrb[0].mxu0
    %v1611 = vadd.f32 0.0, %v1610
    %v1612 = vpop.f32.mrb[0].mxu0
    %1613 = vdwg.mxu0
    %v1614 = vadd.f32 %v1558, %v1608
    %v1615 = vadd.f32 %v1561, %v1611
    %v1616 = vpack.c.bf16 %v1460, %v1276
    %s1617 = scalar_lea.vmem [#allocation16], 12
    %v1618 = vld [vmem:[%s1617] sm:$0xf]
    %v1620 = vsel %vm315, %v1616, 0
    %v1623 = vsel %vm328, %v1618, 0
    %1625 = vmatprep.subr.bf16.mxu0 0
    %1626 = vmatpush1.bf16.msra.mxu0 %v1623
    %1627 = vmatprep.subr.bf16.mxu0 0
    %1628 = vmatpush1.bf16.msra.mxu0 0
    %1629 = vmatprep.subr.bf16.mxu0 0
    %1630 = vmatpush1.bf16.msra.mxu0 0
    %1631 = vmatprep.subr.bf16.mxu0 0
    %1632 = vmatpush1.bf16.msra.mxu0 0
    %1633 = vmatprep.subr.bf16.mxu0 0
    %1634 = vmatpush1.bf16.msra.mxu0 0
    %1635 = vmatprep.subr.bf16.mxu0 0
    %1636 = vmatpush1.bf16.msra.mxu0 0
    %1637 = vmatprep.subr.bf16.mxu0 0
    %1638 = vmatpush1.bf16.msra.mxu0 0
    %1639 = vmatprep.subr.bf16.mxu0 0
    %1640 = vmatpush1.bf16.msra.mxu0 0
    %1641 = vmatprep.subr.bf16.mxu0 0
    %1642 = vmatpush1.bf16.msra.mxu0 0
    %1643 = vmatprep.subr.bf16.mxu0 0
    %1644 = vmatpush1.bf16.msra.mxu0 0
    %1645 = vmatprep.subr.bf16.mxu0 0
    %1646 = vmatpush1.bf16.msra.mxu0 0
    %1647 = vmatprep.subr.bf16.mxu0 0
    %1648 = vmatpush1.bf16.msra.mxu0 0
    %1649 = vmatprep.subr.bf16.mxu0 0
    %1650 = vmatpush1.bf16.msra.mxu0 0
    %1651 = vmatprep.subr.bf16.mxu0 0
    %1652 = vmatpush1.bf16.msra.mxu0 0
    %1653 = vmatprep.subr.bf16.mxu0 0
    %1654 = vmatpush1.bf16.msra.mxu0 0
    %1655 = vmatprep.subr.bf16.mxu0 0
    %1656 = vmatpush1.bf16.msra.mxu0 0
    %1657 = vmatprep.mubr.bf16.mxu0 0
    %1658 = vmatmul.mubr.bf16.gmra.mrb[0].mxu0 %v1620
    %v1659 = vpop.f32.mrb[0].mxu0
    %v1660 = vadd.f32 0.0, %v1659
    %v1661 = vpop.f32.mrb[0].mxu0
    %v1662 = vpop.f32.mrb[0].mxu0
    %v1663 = vadd.f32 0.0, %v1662
    %v1664 = vpop.f32.mrb[0].mxu0
    %1665 = vdwg.mxu0
    %v1666 = vadd.f32 %v1614, %v1660
    %v1667 = vadd.f32 %v1615, %v1663
    %v1668 = vld [vmem:[#allocation10] sm:$0xff]
    %v1669 = vld [vmem:[#allocation10 + $0x8] sm:$0xff]
    %v1670 = vadd.f32 %v1666, %v1668
    %v1671 = vadd.f32 %v1667, %v1669
    %v1672 = vld [vmem:[#allocation23] sm:$0x1]
    %v1673 = vld [vmem:[#allocation25] sm:$0x1]
    %vm1674 = vcmask 261120
    %v1675 = vsel %vm1674, %v1670, 0.0
    %1676 = vadd.xlane.f32.xlu0 %v1675
    %v1677 = vpop.xlane.xlu0 %1676
    %v1678 = vsel %vm1674, %v1671, 0.0
    %1679 = vadd.xlane.f32.xlu0 %v1678
    %v1680 = vpop.xlane.xlu0 %1679
    %v1681 = vrcp.pop 32.0
    %v1682 = vmul.f32 %v1677, %v1681
    %v1683 = vmul.f32 %v1680, %v1681
    %v1684 = vsub.f32 %v1670, %v1682
    %v1685 = vsub.f32 %v1671, %v1683
    %v1686 = vmul.f32 %v1684, %v1684
    %v1687 = vmul.f32 %v1685, %v1685
    %v1688 = vsel %vm1674, %v1686, 0.0
    %1689 = vadd.xlane.f32.xlu0 %v1688
    %v1690 = vpop.xlane.xlu0 %1689
    %v1691 = vsel %vm1674, %v1687, 0.0
    %1692 = vadd.xlane.f32.xlu0 %v1691
    %v1693 = vpop.xlane.xlu0 %1692
    %v1694 = vmul.f32 %v1690, %v1681
    %v1695 = vmul.f32 %v1693, %v1681
    %v1696 = vadd.f32 %v1694, 1e-05
    %v1697 = vadd.f32 %v1695, 1e-05
    %v1698 = vrsqrt.pop %v1696
    %v1699 = vrsqrt.pop %v1697
    %v1700 = vmul.f32 %v1684, %v1698
    %v1701 = vmul.f32 %v1685, %v1699
    %v1703 = vlaneseq
    %v1704 = vshrl.u32 %v1703, 7
    %v1705 = vsub.s32 0, %v1704
    %v1706 = vrot.slane %v1672, %v1705
    %v1708 = vmul.f32 %v1700, %v1706
    %v1709 = vmul.f32 %v1701, %v1706
    %v1711 = vlaneseq
    %v1712 = vshrl.u32 %v1711, 7
    %v1713 = vsub.s32 0, %v1712
    %v1714 = vrot.slane %v1673, %v1713
    %v1716 = vadd.f32 %v1708, %v1714
    %v1717 = vadd.f32 %v1709, %v1714
    %v1718 = vpack.c.bf16 %v1717, %v1716
    %v1719 = vld [vmem:[#allocation17] sm:$0xf]
    %v1720 = vld [vmem:[#allocation17 + $0x4] sm:$0xf]
    %v1721 = vld [vmem:[#allocation17 + $0x8] sm:$0xf]
    %v1722 = vld [vmem:[#allocation17 + $0xc] sm:$0xf]
    %v1723 = vld [vmem:[#allocation19] sm:$0x1]
    %v1725 = vlaneseq
    %v1726 = vshrl.u32 %v1725, 7
    %v1727 = vsub.s32 0, %v1726
    %v1728 = vrot.slane %v1723, %v1727
    %v1734 = vunpack.c.l.b16 %v1719
    %v1735 = vunpack.c.l.b16 %v1720
    %v1736 = vunpack.c.l.b16 %v1721
    %v1737 = vunpack.c.l.b16 %v1722
    %v1738 = vpack.c.b16 %v1735, %v1734
    %v1739 = vpack.c.b16 %v1737, %v1736
    %v1743 = vsel %vm1674, %v1718, 0
    %1745 = vmatprep.subr.bf16.mxu0 0
    %1746 = vmatpush1.bf16.msra.mxu0 %v1738
    %1747 = vmatprep.subr.bf16.mxu0 0
    %1748 = vmatpush1.bf16.msra.mxu0 %v1739
    %1749 = vmatprep.subr.bf16.mxu0 0
    %1750 = vmatpush1.bf16.msra.mxu0 0
    %1751 = vmatprep.subr.bf16.mxu0 0
    %1752 = vmatpush1.bf16.msra.mxu0 0
    %1753 = vmatprep.subr.bf16.mxu0 0
    %1754 = vmatpush1.bf16.msra.mxu0 0
    %1755 = vmatprep.subr.bf16.mxu0 0
    %1756 = vmatpush1.bf16.msra.mxu0 0
    %1757 = vmatprep.subr.bf16.mxu0 0
    %1758 = vmatpush1.bf16.msra.mxu0 0
    %1759 = vmatprep.subr.bf16.mxu0 0
    %1760 = vmatpush1.bf16.msra.mxu0 0
    %1761 = vmatprep.subr.bf16.mxu0 0
    %1762 = vmatpush1.bf16.msra.mxu0 0
    %1763 = vmatprep.subr.bf16.mxu0 0
    %1764 = vmatpush1.bf16.msra.mxu0 0
    %1765 = vmatprep.subr.bf16.mxu0 0
    %1766 = vmatpush1.bf16.msra.mxu0 0
    %1767 = vmatprep.subr.bf16.mxu0 0
    %1768 = vmatpush1.bf16.msra.mxu0 0
    %1769 = vmatprep.subr.bf16.mxu0 0
    %1770 = vmatpush1.bf16.msra.mxu0 0
    %1771 = vmatprep.subr.bf16.mxu0 0
    %1772 = vmatpush1.bf16.msra.mxu0 0
    %1773 = vmatprep.subr.bf16.mxu0 0
    %1774 = vmatpush1.bf16.msra.mxu0 0
    %1775 = vmatprep.subr.bf16.mxu0 0
    %1776 = vmatpush1.bf16.msra.mxu0 0
    %1777 = vmatprep.mubr.bf16.mxu0 0
    %1778 = vmatmul.mubr.bf16.gmra.mrb[0].mxu0 %v1743
    %v1779 = vpop.f32.mrb[0].mxu0
    %v1780 = vadd.f32 %v1728, %v1779
    %v1781 = vpop.f32.mrb[0].mxu0
    %v1782 = vpop.f32.mrb[0].mxu0
    %v1783 = vadd.f32 %v1728, %v1782
    %v1784 = vpop.f32.mrb[0].mxu0
    %1785 = vdwg.mxu0
    %v1786 = vmax.f32 %v1780, 0.0
    %v1787 = vmax.f32 %v1783, 0.0
    %v1788 = vpack.c.bf16 %v1787, %v1786
    %v1789 = vld [vmem:[#allocation20] sm:$0xf]
    %v1790 = vld [vmem:[#allocation20 + $0x4] sm:$0xf]
    %v1791 = vld [vmem:[#allocation20 + $0x8] sm:$0xf]
    %v1792 = vld [vmem:[#allocation20 + $0xc] sm:$0xf]
    %v1793 = vld [vmem:[#allocation20 + $0x10] sm:$0xf]
    %v1794 = vld [vmem:[#allocation20 + $0x14] sm:$0xf]
    %v1795 = vld [vmem:[#allocation20 + $0x18] sm:$0xf]
    %v1796 = vld [vmem:[#allocation20 + $0x1c] sm:$0xf]
    %v1797 = vld [vmem:[#allocation20 + $0x20] sm:$0xf]
    %v1798 = vld [vmem:[#allocation20 + $0x24] sm:$0xf]
    %v1799 = vld [vmem:[#allocation20 + $0x28] sm:$0xf]
    %v1800 = vld [vmem:[#allocation20 + $0x2c] sm:$0xf]
    %v1801 = vld [vmem:[#allocation20 + $0x30] sm:$0xf]
    %v1802 = vld [vmem:[#allocation20 + $0x34] sm:$0xf]
    %v1803 = vld [vmem:[#allocation20 + $0x38] sm:$0xf]
    %v1804 = vld [vmem:[#allocation20 + $0x3c] sm:$0xf]
    %v1805 = vld [vmem:[#allocation22] sm:$0x1]
    %v1807 = vlaneseq
    %v1808 = vshrl.u32 %v1807, 7
    %v1809 = vsub.s32 0, %v1808
    %v1810 = vrot.slane %v1805, %v1809
    %v1828 = vunpack.c.l.b16 %v1789
    %v1829 = vunpack.c.l.b16 %v1790
    %v1830 = vunpack.c.l.b16 %v1791
    %v1831 = vunpack.c.l.b16 %v1792
    %v1832 = vunpack.c.l.b16 %v1793
    %v1833 = vunpack.c.l.b16 %v1794
    %v1834 = vunpack.c.l.b16 %v1795
    %v1835 = vunpack.c.l.b16 %v1796
    %v1836 = vunpack.c.l.b16 %v1797
    %v1837 = vunpack.c.l.b16 %v1798
    %v1838 = vunpack.c.l.b16 %v1799
    %v1839 = vunpack.c.l.b16 %v1800
    %v1840 = vunpack.c.l.b16 %v1801
    %v1841 = vunpack.c.l.b16 %v1802
    %v1842 = vunpack.c.l.b16 %v1803
    %v1843 = vunpack.c.l.b16 %v1804
    %v1844 = vpack.c.b16 %v1829, %v1828
    %v1845 = vpack.c.b16 %v1831, %v1830
    %v1846 = vpack.c.b16 %v1833, %v1832
    %v1847 = vpack.c.b16 %v1835, %v1834
    %v1848 = vpack.c.b16 %v1837, %v1836
    %v1849 = vpack.c.b16 %v1839, %v1838
    %v1850 = vpack.c.b16 %v1841, %v1840
    %v1851 = vpack.c.b16 %v1843, %v1842
    %1860 = vmatprep.subr.bf16.mxu0 0
    %1861 = vmatpush1.bf16.msra.mxu0 %v1844
    %1862 = vmatprep.subr.bf16.mxu0 0
    %1863 = vmatpush1.bf16.msra.mxu0 %v1845
    %1864 = vmatprep.subr.bf16.mxu0 0
    %1865 = vmatpush1.bf16.msra.mxu0 %v1846
    %1866 = vmatprep.subr.bf16.mxu0 0
    %1867 = vmatpush1.bf16.msra.mxu0 %v1847
    %1868 = vmatprep.subr.bf16.mxu0 0
    %1869 = vmatpush1.bf16.msra.mxu0 %v1848
    %1870 = vmatprep.subr.bf16.mxu0 0
    %1871 = vmatpush1.bf16.msra.mxu0 %v1849
    %1872 = vmatprep.subr.bf16.mxu0 0
    %1873 = vmatpush1.bf16.msra.mxu0 %v1850
    %1874 = vmatprep.subr.bf16.mxu0 0
    %1875 = vmatpush1.bf16.msra.mxu0 %v1851
    %1876 = vmatprep.subr.bf16.mxu0 0
    %1877 = vmatpush1.bf16.msra.mxu0 0
    %1878 = vmatprep.subr.bf16.mxu0 0
    %1879 = vmatpush1.bf16.msra.mxu0 0
    %1880 = vmatprep.subr.bf16.mxu0 0
    %1881 = vmatpush1.bf16.msra.mxu0 0
    %1882 = vmatprep.subr.bf16.mxu0 0
    %1883 = vmatpush1.bf16.msra.mxu0 0
    %1884 = vmatprep.subr.bf16.mxu0 0
    %1885 = vmatpush1.bf16.msra.mxu0 0
    %1886 = vmatprep.subr.bf16.mxu0 0
    %1887 = vmatpush1.bf16.msra.mxu0 0
    %1888 = vmatprep.subr.bf16.mxu0 0
    %1889 = vmatpush1.bf16.msra.mxu0 0
    %1890 = vmatprep.subr.bf16.mxu0 0
    %1891 = vmatpush1.bf16.msra.mxu0 0
    %1892 = vmatprep.mubr.bf16.mxu0 0
    %1893 = vmatmul.mubr.bf16.gmra.mrb[0].mxu0 %v1788
    %v1894 = vpop.f32.mrb[0].mxu0
    %v1895 = vadd.f32 %v1810, %v1894
    %v1896 = vpop.f32.mrb[0].mxu0
    %v1897 = vpop.f32.mrb[0].mxu0
    %v1898 = vadd.f32 %v1810, %v1897
    %v1899 = vpop.f32.mrb[0].mxu0
    %1900 = vdwg.mxu0
    %v1901 = vadd.f32 %v1895, %v1716
    %v1902 = vadd.f32 %v1898, %v1717
    %v1903 = vld [vmem:[#allocation26] sm:$0x1]
    %v1904 = vld [vmem:[#allocation28] sm:$0x1]
    %v1905 = vsel %vm1674, %v1901, 0.0
    %1906 = vadd.xlane.f32.xlu0 %v1905
    %v1907 = vpop.xlane.xlu0 %1906
    %v1908 = vsel %vm1674, %v1902, 0.0
    %1909 = vadd.xlane.f32.xlu0 %v1908
    %v1910 = vpop.xlane.xlu0 %1909
    %v1911 = vmul.f32 %v1907, %v1681
    %v1912 = vmul.f32 %v1910, %v1681
    %v1913 = vsub.f32 %v1901, %v1911
    %v1914 = vsub.f32 %v1902, %v1912
    %v1915 = vmul.f32 %v1913, %v1913
    %v1916 = vmul.f32 %v1914, %v1914
    %v1917 = vsel %vm1674, %v1915, 0.0
    %1918 = vadd.xlane.f32.xlu0 %v1917
    %v1919 = vpop.xlane.xlu0 %1918
    %v1920 = vsel %vm1674, %v1916, 0.0
    %1921 = vadd.xlane.f32.xlu0 %v1920
    %v1922 = vpop.xlane.xlu0 %1921
    %v1923 = vmul.f32 %v1919, %v1681
    %v1924 = vmul.f32 %v1922, %v1681
    %v1925 = vadd.f32 %v1923, 1e-05
    %v1926 = vadd.f32 %v1924, 1e-05
    %v1927 = vrsqrt.pop %v1925
    %v1928 = vrsqrt.pop %v1926
    %v1929 = vmul.f32 %v1913, %v1927
    %v1930 = vmul.f32 %v1914, %v1928
    %v1932 = vlaneseq
    %v1933 = vshrl.u32 %v1932, 7
    %v1934 = vsub.s32 0, %v1933
    %v1935 = vrot.slane %v1903, %v1934
    %v1937 = vmul.f32 %v1929, %v1935
    %v1938 = vmul.f32 %v1930, %v1935
    %v1940 = vlaneseq
    %v1941 = vshrl.u32 %v1940, 7
    %v1942 = vsub.s32 0, %v1941
    %v1943 = vrot.slane %v1904, %v1942
    %v1945 = vadd.f32 %v1937, %v1943
    %v1946 = vadd.f32 %v1938, %v1943
    %1947 = vst.msk [vmem:[#allocation29] sm:$0xff] %vm1674, %v1945
    %1948 = vst.msk [vmem:[#allocation29 + $0x8] sm:$0xff] %vm1674, %v1946
    // Predicated region
    $region138: #{tpu_custom_call.1} parent=1 // pred_check
      _
    $region139: #{tpu_custom_call.1} parent=1 // pred_check_branch
      %1950 = sbr.rel (0) target = $region141
    $region140: #{tpu_custom_call.1} parent=1 // pred_region
      %s1952 = ssub.s32 256, 256
      %1953 = vsyncadd [#allocation4], %s1952
      %s1954 = sshll.u32 [#allocation29], 4
      %s1955 = int_to_ptr.vmem [resolvable:$true] %s1954
      %1960 = dma.vmem_to_hbm [thread:$0]  %s1955, 256, %s17, [#allocation4], 128, 128, 8
    $region141: #{tpu_custom_call.1} parent=1 // pred_fallthru
      _
    // Predicated region
    $region142: #{tpu_custom_call.1} parent=1 // pred_check
      _
    $region143: #{tpu_custom_call.1} parent=1 // pred_check_branch
      %1962 = sbr.rel (0) target = $region145
    $region144: #{tpu_custom_call.1} parent=1 // pred_region
      %1963 = dma.done [#allocation4], 256
    $region145: #{tpu_custom_call.1} parent=1 // pred_fallthru
      _
    %1964 = vsyncpa [#allocation3], 1
    %1965 = vsyncpa [#allocation6], 1
    %1966 = vsyncpa [#allocation9], 1
    %1967 = vsyncpa [#allocation12], 1
    %1968 = vsyncpa [#allocation15], 1
    %1969 = vsyncpa [#allocation18], 1
    %1970 = vsyncpa [#allocation21], 1
    %1971 = vsyncpa [#allocation24], 1
    %1972 = vsyncpa [#allocation27], 1
    %1973 = vsyncpa [#allocation4], 1

</llo_original>
